<compile_context>
chip_gen: v7x
topology: tpu7x:2x2x1
jax: 0.10.0
libtpu: 0.0.40
codegen_flags: <defaults>
</compile_context>

<pallas_src>
import functools

import jax
import jax.numpy as jnp
from jax.experimental import pallas as pl
from jax.experimental.pallas import tpu as pltpu


# ----------------------------- Pallas kernel -------------------------------

def sarcasm_kernel(x_ref,        # (T*Bp, E)  bf16, time-major rows: row = t*Bp + b
                   w_in_f_ref,   # (E, G)     bf16, fwd input weights placed at fwd gate cols
                   w_in_b_ref,   # (E, G)     bf16, bwd input weights placed at bwd gate cols
                   b_ref,        # (1, G)     f32, combined (fwd+bwd) gate biases
                   w_rec_ref,    # (H2, G)    bf16, block-structured recurrent weight
                   w_out_ref,    # (H2, 128)  f32, classifier head (lane-padded)
                   b_out_ref,    # (1, 128)   f32
                   out_ref,      # (Bp, 128)  f32 logits (cols 0:2 real)
                   *, T, Bp):
    H2, G = w_rec_ref.shape          # 128, 512
    gate = G // 4                    # 128-lane gate block width (== H2)

    x = x_ref[...]                   # bf16 (T*Bp, E)
    bias = b_ref[...]                # f32  (1, G)

    # ---- Hoisted input projections: two pipelineable MXU matmuls over all
    #      timesteps at once; both directions' biases folded in here. ----
    zf = jnp.dot(x, w_in_f_ref[...], preferred_element_type=jnp.float32) + bias
    zb = jnp.dot(x, w_in_b_ref[...], preferred_element_type=jnp.float32)

    w_rec = w_rec_ref[...]           # bf16 (H2, G)

    h = jnp.zeros((Bp, H2), jnp.float32)
    c = jnp.zeros((Bp, H2), jnp.float32)

    # ---- Merged fwd+bwd recurrence, fully unrolled (T static & small).
    #      One (Bp, 128) @ (128, 512) bf16 matmul per step; the time reversal
    #      for the backward direction is just the zb row offset. ----
    # TODO(synk): for large T switch to lax.fori_loop(..., unroll=4..8) over
    # ds-slices to bound vreg live ranges / code size.
    for t in range(T):
        rf = t * Bp                  # fwd input rows
        rb = (T - 1 - t) * Bp        # bwd input rows (reversed time)
        z = (zf[rf:rf + Bp, :] + zb[rb:rb + Bp, :]
             + jnp.dot(h.astype(jnp.bfloat16), w_rec,
                       preferred_element_type=jnp.float32))
        # gate layout [i | f | o | g], each block [fwd(64) | bwd(64)] = 128 lanes
        ifo = jax.nn.sigmoid(z[:, :3 * gate])     # one contiguous sigmoid
        g_g = jnp.tanh(z[:, 3 * gate:])           # one contiguous tanh
        i_g = ifo[:, :gate]
        f_g = ifo[:, gate:2 * gate]
        o_g = ifo[:, 2 * gate:]
        c = f_g * c + i_g * g_g
        h = o_g * jnp.tanh(c)

    # h == [h_fwd_pad | h_bwd_pad] == PyTorch concat(h_n[-2], h_n[-1]) (padded
    # cols are exactly zero).  Lane-dense 128-wide classifier output.
    out_ref[...] = (jnp.dot(h, w_out_ref[...], preferred_element_type=jnp.float32)
                    + b_out_ref[...])


# ------------------------- parameter setup (glue) ----------------------------

def init_params(key, voc_size, embed_dim, hidden_size):
    ks = jax.random.split(key, 10)
    H, E = hidden_size, embed_dim
    s = 0.1
    params = {
        "embed": s * jax.random.normal(ks[0], (voc_size, E), jnp.float32),
        # stored pre-transposed: (in_dim, 4H), gate column order i,f,g,o (PyTorch)
        "wih_f": s * jax.random.normal(ks[1], (E, 4 * H), jnp.float32),
        "whh_f": s * jax.random.normal(ks[2], (H, 4 * H), jnp.float32),
        "b_f":   s * jax.random.normal(ks[3], (1, 4 * H), jnp.float32),   # b_ih + b_hh
        "wih_b": s * jax.random.normal(ks[4], (E, 4 * H), jnp.float32),
        "whh_b": s * jax.random.normal(ks[5], (H, 4 * H), jnp.float32),
        "b_b":   s * jax.random.normal(ks[6], (1, 4 * H), jnp.float32),   # b_ih + b_hh
        "wlin":  s * jax.random.normal(ks[7], (2 * H, 2), jnp.float32),
        "blin":  s * jax.random.normal(ks[8], (1, 2), jnp.float32),
    }
    return params


# PyTorch gate order is [i, f, g, o]; combined kernel layout is [i, f, o, g]
# (sigmoid gates contiguous).  slot k of the combined layout takes PyTorch
# gate _PT2PACK[k].
_PT2PACK = (0, 1, 3, 2)


def _place_dir(w, H, HP, dir_off):
    """(R, 4H) PyTorch-order weights -> (R, 8*HP) combined layout.

    Combined layout: 4 gate blocks of width 2*HP, gate order [i|f|o|g]; inside
    each block, lanes [0:HP] are fwd and [HP:2HP] are bwd; this direction's
    real H columns land at offset dir_off*HP (rest zero-padded to 128 lanes).
    """
    R = w.shape[0]
    w4 = w.reshape(R, 4, H)
    out = jnp.zeros((R, 4, 2 * HP), w.dtype)
    base = dir_off * HP
    for slot, pt in enumerate(_PT2PACK):
        out = out.at[:, slot, base:base + H].set(w4[:, pt, :])
    return out.reshape(R, 8 * HP)


def build_kernel_params(params):
    """One-time repack of per-direction LSTM weights into the merged, padded,
    reordered block layout.  Called ONCE, outside the jitted forward."""
    E = params["wih_f"].shape[0]
    H = params["whh_f"].shape[0]
    HP = ((2 * H + 127) // 128) * 128 // 2      # pad per-direction hidden so H2 = 128k
    H2 = 2 * HP
    G = 4 * H2

    # (E, G): input weights, each direction placed at its own gate sub-columns.
    w_in_f = _place_dir(params["wih_f"], H, HP, 0)
    w_in_b = _place_dir(params["wih_b"], H, HP, 1)

    # (H2, G) recurrent weight: rows [0:H] are real h_fwd, rows [HP:HP+H] real h_bwd.
    w_rec = jnp.zeros((H2, G), jnp.float32)
    w_rec = w_rec.at[0:H, :].set(_place_dir(params["whh_f"], H, HP, 0))
    w_rec = w_rec.at[HP:HP + H, :].set(_place_dir(params["whh_b"], H, HP, 1))

    # (1, G) combined biases (fwd + bwd placed at their own columns).
    b_comb = (_place_dir(params["b_f"], H, HP, 0)
              + _place_dir(params["b_b"], H, HP, 1))

    # Classifier head: (H2, 128) lane-padded output; feat = [h_fwd | h_bwd].
    OUT = 128
    w_out = jnp.zeros((H2, OUT), jnp.float32)
    w_out = w_out.at[0:H, 0:2].set(params["wlin"][0:H])          # fwd part
    w_out = w_out.at[HP:HP + H, 0:2].set(params["wlin"][H:2 * H])  # bwd part
    b_out = jnp.zeros((1, OUT), jnp.float32).at[:, 0:2].set(params["blin"])

    # bf16 MXU operands; biases / head stay f32.
    return (w_in_f.astype(jnp.bfloat16),
            w_in_b.astype(jnp.bfloat16),
            b_comb,
            w_rec.astype(jnp.bfloat16),
            w_out,
            b_out)


# ------------------------------ JAX wrapper ---------------------------------

@jax.jit
def sarcasm_forward(tokens, embed_table, kparams):
    """tokens: (B, T) int32 token ids -> (B, 2) float32 logits."""
    B, T = tokens.shape
    Bp = max(8, ((B + 7) // 8) * 8)               # pad batch to the 8-sublane tile
    w_in_f, w_in_b, b_comb, w_rec, w_out, b_out = kparams

    emb = embed_table[tokens].astype(jnp.float32)              # (B, T, E) gather (glue)
    emb = jnp.pad(emb, ((0, Bp - B), (0, 0), (0, 0)))          # (Bp, T, E)
    # time-major, pre-flattened: row = t*Bp + b  (no reshape inside the kernel)
    x = jnp.transpose(emb, (1, 0, 2)).reshape(T * Bp, -1).astype(jnp.bfloat16)

    kern = functools.partial(sarcasm_kernel, T=T, Bp=Bp)
    vmem = pl.BlockSpec(memory_space=pltpu.MemorySpace.VMEM)
    logits_p = pl.pallas_call(
        kern,
        out_shape=jax.ShapeDtypeStruct((Bp, 128), jnp.float32),
        in_specs=[vmem] * 7,
        out_specs=vmem,
    )(x, w_in_f, w_in_b, b_comb, w_rec, w_out, b_out)

    # drop batch padding rows and output lane padding before returning
    return logits_p[:B, :2]
    # TODO(synk): for large B add a "parallel" batch grid axis (v7x 2-TC
    # sharding) with T-blocked BlockSpecs so activations stream under the
    # 32 MiB (v6e/v7x) scoped-VMEM default instead of sitting whole in VMEM.


# --------------------------- Pure-JAX reference ------------------------------

def _ref_cell(x_t, h, c, wih, whh, b, H):
    z = x_t @ wih + h @ whh + b
    i = jax.nn.sigmoid(z[:, 0 * H:1 * H])
    f = jax.nn.sigmoid(z[:, 1 * H:2 * H])
    g = jnp.tanh(z[:, 2 * H:3 * H])
    o = jax.nn.sigmoid(z[:, 3 * H:4 * H])
    c = f * c + i * g
    return o * jnp.tanh(c), c


def sarcasm_forward_ref(tokens, params):
    emb = params["embed"][tokens].astype(jnp.float32)   # (B, T, E)
    B, T, E = emb.shape
    H = params["whh_f"].shape[0]
    h = c = jnp.zeros((B, H), jnp.float32)
    for t in range(T):
        h, c = _ref_cell(emb[:, t, :], h, c,
                         params["wih_f"], params["whh_f"], params["b_f"], H)
    h_fwd = h
    h = c = jnp.zeros((B, H), jnp.float32)
    for t in range(T - 1, -1, -1):
        h, c = _ref_cell(emb[:, t, :], h, c,
                         params["wih_b"], params["whh_b"], params["b_b"], H)
    h_bwd = h
    feat = jnp.concatenate([h_fwd, h_bwd], axis=1)
    return feat @ params["wlin"] + params["blin"]


# --------------------------------- main --------------------------------------

if __name__ == "__main__":
    VOC, E, H = 64, 32, 32
    B, T = 2, 8

    key = jax.random.PRNGKey(0)
    k_tok, k_par = jax.random.split(key)
    tokens = jax.random.randint(k_tok, (B, T), 0, VOC, dtype=jnp.int32)
    params = init_params(k_par, VOC, E, H)

    # one-time weight repack, hoisted out of the (jitted) per-call path
    kparams = build_kernel_params(params)

    logits = jax.block_until_ready(sarcasm_forward(tokens, params["embed"], kparams))
    ref = jax.block_until_ready(sarcasm_forward_ref(tokens, params))

    assert logits.shape == (B, 2)
    # bf16 MXU operands (f32 accumulate) vs. an all-f32 reference -> modest tol.
    assert jnp.allclose(logits, ref, rtol=5e-3, atol=5e-3), (logits, ref)
    print("KERNEL_OK")
</pallas_src>

<mosaic_0001>
module attributes {stable_mosaic.version = 11 : i64} {
  func.func @sarcasm_kernel(%arg0: memref<64x32xbf16, #tpu.memory_space<vmem>>, %arg1: memref<32x512xbf16, #tpu.memory_space<vmem>>, %arg2: memref<32x512xbf16, #tpu.memory_space<vmem>>, %arg3: memref<1x512xf32, #tpu.memory_space<vmem>>, %arg4: memref<128x512xbf16, #tpu.memory_space<vmem>>, %arg5: memref<128x128xf32, #tpu.memory_space<vmem>>, %arg6: memref<1x128xf32, #tpu.memory_space<vmem>>, %arg7: memref<8x128xf32, #tpu.memory_space<vmem>>) attributes {dimension_semantics = [], scalar_prefetch = 0 : i64, scratch_operands = 0 : i64, tpu.core_type = #tpu.core_type<tc>} {
    %c0 = arith.constant 0 : index
    %c0_0 = arith.constant 0 : index
    %0 = vector.load %arg0[%c0, %c0_0] : memref<64x32xbf16, #tpu.memory_space<vmem>>, vector<64x32xbf16>
    %c0_1 = arith.constant 0 : index
    %c0_2 = arith.constant 0 : index
    %1 = vector.load %arg3[%c0_1, %c0_2] : memref<1x512xf32, #tpu.memory_space<vmem>>, vector<1x512xf32>
    %c0_3 = arith.constant 0 : index
    %c0_4 = arith.constant 0 : index
    %2 = vector.load %arg1[%c0_3, %c0_4] : memref<32x512xbf16, #tpu.memory_space<vmem>>, vector<32x512xbf16>
    %cst = arith.constant dense<0.000000e+00> : vector<64x512xf32>
    %3 = tpu.matmul %0, %2, %cst {dimension_numbers = #tpu.dot_dimension_numbers<[1], [0], [0], [1], [0, 0, 1, 1], [], []>} : vector<64x32xbf16>, vector<32x512xbf16>, vector<64x512xf32> -> vector<64x512xf32>
    %4 = vector.broadcast %1 : vector<1x512xf32> to vector<64x512xf32>
    %5 = arith.addf %3, %4 : vector<64x512xf32>
    %c0_5 = arith.constant 0 : index
    %c0_6 = arith.constant 0 : index
    %6 = vector.load %arg2[%c0_5, %c0_6] : memref<32x512xbf16, #tpu.memory_space<vmem>>, vector<32x512xbf16>
    %cst_7 = arith.constant dense<0.000000e+00> : vector<64x512xf32>
    %7 = tpu.matmul %0, %6, %cst_7 {dimension_numbers = #tpu.dot_dimension_numbers<[1], [0], [0], [1], [0, 0, 1, 1], [], []>} : vector<64x32xbf16>, vector<32x512xbf16>, vector<64x512xf32> -> vector<64x512xf32>
    %c0_8 = arith.constant 0 : index
    %c0_9 = arith.constant 0 : index
    %8 = vector.load %arg4[%c0_8, %c0_9] : memref<128x512xbf16, #tpu.memory_space<vmem>>, vector<128x512xbf16>
    %cst_10 = arith.constant 0.000000e+00 : f32
    %9 = vector.broadcast %cst_10 : f32 to vector<8x128xf32>
    %cst_11 = arith.constant 0.000000e+00 : f32
    %10 = vector.broadcast %cst_11 : f32 to vector<8x128xf32>
    %11 = vector.extract_strided_slice %5 {offsets = [0, 0], sizes = [8, 512], strides = [1, 1]} : vector<64x512xf32> to vector<8x512xf32>
    %12 = vector.extract_strided_slice %7 {offsets = [56, 0], sizes = [8, 512], strides = [1, 1]} : vector<64x512xf32> to vector<8x512xf32>
    %13 = arith.addf %11, %12 : vector<8x512xf32>
    %14 = arith.truncf %9 : vector<8x128xf32> to vector<8x128xbf16>
    %cst_12 = arith.constant dense<0.000000e+00> : vector<8x512xf32>
    %15 = tpu.matmul %14, %8, %cst_12 {dimension_numbers = #tpu.dot_dimension_numbers<[1], [0], [0], [1], [0, 0, 1, 1], [], []>} : vector<8x128xbf16>, vector<128x512xbf16>, vector<8x512xf32> -> vector<8x512xf32>
    %16 = arith.addf %13, %15 : vector<8x512xf32>
    %17 = vector.extract_strided_slice %16 {offsets = [0, 0], sizes = [8, 384], strides = [1, 1]} : vector<8x512xf32> to vector<8x384xf32>
    %18 = arith.negf %17 : vector<8x384xf32>
    %19 = math.exp %18 : vector<8x384xf32>
    %cst_13 = arith.constant 1.000000e+00 : f32
    %20 = vector.broadcast %cst_13 : f32 to vector<8x384xf32>
    %21 = arith.addf %20, %19 : vector<8x384xf32>
    %22 = arith.divf %20, %21 : vector<8x384xf32>
    %23 = vector.extract_strided_slice %16 {offsets = [0, 384], sizes = [8, 128], strides = [1, 1]} : vector<8x512xf32> to vector<8x128xf32>
    %24 = math.tanh %23 : vector<8x128xf32>
    %25 = vector.extract_strided_slice %22 {offsets = [0, 0], sizes = [8, 128], strides = [1, 1]} : vector<8x384xf32> to vector<8x128xf32>
    %26 = vector.extract_strided_slice %22 {offsets = [0, 128], sizes = [8, 128], strides = [1, 1]} : vector<8x384xf32> to vector<8x128xf32>
    %27 = vector.extract_strided_slice %22 {offsets = [0, 256], sizes = [8, 128], strides = [1, 1]} : vector<8x384xf32> to vector<8x128xf32>
    %28 = arith.mulf %26, %10 : vector<8x128xf32>
    %29 = arith.mulf %25, %24 : vector<8x128xf32>
    %30 = arith.addf %28, %29 : vector<8x128xf32>
    %31 = math.tanh %30 : vector<8x128xf32>
    %32 = arith.mulf %27, %31 : vector<8x128xf32>
    %33 = vector.extract_strided_slice %5 {offsets = [8, 0], sizes = [8, 512], strides = [1, 1]} : vector<64x512xf32> to vector<8x512xf32>
    %34 = vector.extract_strided_slice %7 {offsets = [48, 0], sizes = [8, 512], strides = [1, 1]} : vector<64x512xf32> to vector<8x512xf32>
    %35 = arith.addf %33, %34 : vector<8x512xf32>
    %36 = arith.truncf %32 : vector<8x128xf32> to vector<8x128xbf16>
    %cst_14 = arith.constant dense<0.000000e+00> : vector<8x512xf32>
    %37 = tpu.matmul %36, %8, %cst_14 {dimension_numbers = #tpu.dot_dimension_numbers<[1], [0], [0], [1], [0, 0, 1, 1], [], []>} : vector<8x128xbf16>, vector<128x512xbf16>, vector<8x512xf32> -> vector<8x512xf32>
    %38 = arith.addf %35, %37 : vector<8x512xf32>
    %39 = vector.extract_strided_slice %38 {offsets = [0, 0], sizes = [8, 384], strides = [1, 1]} : vector<8x512xf32> to vector<8x384xf32>
    %40 = arith.negf %39 : vector<8x384xf32>
    %41 = math.exp %40 : vector<8x384xf32>
    %cst_15 = arith.constant 1.000000e+00 : f32
    %42 = vector.broadcast %cst_15 : f32 to vector<8x384xf32>
    %43 = arith.addf %42, %41 : vector<8x384xf32>
    %44 = arith.divf %42, %43 : vector<8x384xf32>
    %45 = vector.extract_strided_slice %38 {offsets = [0, 384], sizes = [8, 128], strides = [1, 1]} : vector<8x512xf32> to vector<8x128xf32>
    %46 = math.tanh %45 : vector<8x128xf32>
    %47 = vector.extract_strided_slice %44 {offsets = [0, 0], sizes = [8, 128], strides = [1, 1]} : vector<8x384xf32> to vector<8x128xf32>
    %48 = vector.extract_strided_slice %44 {offsets = [0, 128], sizes = [8, 128], strides = [1, 1]} : vector<8x384xf32> to vector<8x128xf32>
    %49 = vector.extract_strided_slice %44 {offsets = [0, 256], sizes = [8, 128], strides = [1, 1]} : vector<8x384xf32> to vector<8x128xf32>
    %50 = arith.mulf %48, %30 : vector<8x128xf32>
    %51 = arith.mulf %47, %46 : vector<8x128xf32>
    %52 = arith.addf %50, %51 : vector<8x128xf32>
    %53 = math.tanh %52 : vector<8x128xf32>
    %54 = arith.mulf %49, %53 : vector<8x128xf32>
    %55 = vector.extract_strided_slice %5 {offsets = [16, 0], sizes = [8, 512], strides = [1, 1]} : vector<64x512xf32> to vector<8x512xf32>
    %56 = vector.extract_strided_slice %7 {offsets = [40, 0], sizes = [8, 512], strides = [1, 1]} : vector<64x512xf32> to vector<8x512xf32>
    %57 = arith.addf %55, %56 : vector<8x512xf32>
    %58 = arith.truncf %54 : vector<8x128xf32> to vector<8x128xbf16>
    %cst_16 = arith.constant dense<0.000000e+00> : vector<8x512xf32>
    %59 = tpu.matmul %58, %8, %cst_16 {dimension_numbers = #tpu.dot_dimension_numbers<[1], [0], [0], [1], [0, 0, 1, 1], [], []>} : vector<8x128xbf16>, vector<128x512xbf16>, vector<8x512xf32> -> vector<8x512xf32>
    %60 = arith.addf %57, %59 : vector<8x512xf32>
    %61 = vector.extract_strided_slice %60 {offsets = [0, 0], sizes = [8, 384], strides = [1, 1]} : vector<8x512xf32> to vector<8x384xf32>
    %62 = arith.negf %61 : vector<8x384xf32>
    %63 = math.exp %62 : vector<8x384xf32>
    %cst_17 = arith.constant 1.000000e+00 : f32
    %64 = vector.broadcast %cst_17 : f32 to vector<8x384xf32>
    %65 = arith.addf %64, %63 : vector<8x384xf32>
    %66 = arith.divf %64, %65 : vector<8x384xf32>
    %67 = vector.extract_strided_slice %60 {offsets = [0, 384], sizes = [8, 128], strides = [1, 1]} : vector<8x512xf32> to vector<8x128xf32>
    %68 = math.tanh %67 : vector<8x128xf32>
    %69 = vector.extract_strided_slice %66 {offsets = [0, 0], sizes = [8, 128], strides = [1, 1]} : vector<8x384xf32> to vector<8x128xf32>
    %70 = vector.extract_strided_slice %66 {offsets = [0, 128], sizes = [8, 128], strides = [1, 1]} : vector<8x384xf32> to vector<8x128xf32>
    %71 = vector.extract_strided_slice %66 {offsets = [0, 256], sizes = [8, 128], strides = [1, 1]} : vector<8x384xf32> to vector<8x128xf32>
    %72 = arith.mulf %70, %52 : vector<8x128xf32>
    %73 = arith.mulf %69, %68 : vector<8x128xf32>
    %74 = arith.addf %72, %73 : vector<8x128xf32>
    %75 = math.tanh %74 : vector<8x128xf32>
    %76 = arith.mulf %71, %75 : vector<8x128xf32>
    %77 = vector.extract_strided_slice %5 {offsets = [24, 0], sizes = [8, 512], strides = [1, 1]} : vector<64x512xf32> to vector<8x512xf32>
    %78 = vector.extract_strided_slice %7 {offsets = [32, 0], sizes = [8, 512], strides = [1, 1]} : vector<64x512xf32> to vector<8x512xf32>
    %79 = arith.addf %77, %78 : vector<8x512xf32>
    %80 = arith.truncf %76 : vector<8x128xf32> to vector<8x128xbf16>
    %cst_18 = arith.constant dense<0.000000e+00> : vector<8x512xf32>
    %81 = tpu.matmul %80, %8, %cst_18 {dimension_numbers = #tpu.dot_dimension_numbers<[1], [0], [0], [1], [0, 0, 1, 1], [], []>} : vector<8x128xbf16>, vector<128x512xbf16>, vector<8x512xf32> -> vector<8x512xf32>
    %82 = arith.addf %79, %81 : vector<8x512xf32>
    %83 = vector.extract_strided_slice %82 {offsets = [0, 0], sizes = [8, 384], strides = [1, 1]} : vector<8x512xf32> to vector<8x384xf32>
    %84 = arith.negf %83 : vector<8x384xf32>
    %85 = math.exp %84 : vector<8x384xf32>
    %cst_19 = arith.constant 1.000000e+00 : f32
    %86 = vector.broadcast %cst_19 : f32 to vector<8x384xf32>
    %87 = arith.addf %86, %85 : vector<8x384xf32>
    %88 = arith.divf %86, %87 : vector<8x384xf32>
    %89 = vector.extract_strided_slice %82 {offsets = [0, 384], sizes = [8, 128], strides = [1, 1]} : vector<8x512xf32> to vector<8x128xf32>
    %90 = math.tanh %89 : vector<8x128xf32>
    %91 = vector.extract_strided_slice %88 {offsets = [0, 0], sizes = [8, 128], strides = [1, 1]} : vector<8x384xf32> to vector<8x128xf32>
    %92 = vector.extract_strided_slice %88 {offsets = [0, 128], sizes = [8, 128], strides = [1, 1]} : vector<8x384xf32> to vector<8x128xf32>
    %93 = vector.extract_strided_slice %88 {offsets = [0, 256], sizes = [8, 128], strides = [1, 1]} : vector<8x384xf32> to vector<8x128xf32>
    %94 = arith.mulf %92, %74 : vector<8x128xf32>
    %95 = arith.mulf %91, %90 : vector<8x128xf32>
    %96 = arith.addf %94, %95 : vector<8x128xf32>
    %97 = math.tanh %96 : vector<8x128xf32>
    %98 = arith.mulf %93, %97 : vector<8x128xf32>
    %99 = vector.extract_strided_slice %5 {offsets = [32, 0], sizes = [8, 512], strides = [1, 1]} : vector<64x512xf32> to vector<8x512xf32>
    %100 = vector.extract_strided_slice %7 {offsets = [24, 0], sizes = [8, 512], strides = [1, 1]} : vector<64x512xf32> to vector<8x512xf32>
    %101 = arith.addf %99, %100 : vector<8x512xf32>
    %102 = arith.truncf %98 : vector<8x128xf32> to vector<8x128xbf16>
    %cst_20 = arith.constant dense<0.000000e+00> : vector<8x512xf32>
    %103 = tpu.matmul %102, %8, %cst_20 {dimension_numbers = #tpu.dot_dimension_numbers<[1], [0], [0], [1], [0, 0, 1, 1], [], []>} : vector<8x128xbf16>, vector<128x512xbf16>, vector<8x512xf32> -> vector<8x512xf32>
    %104 = arith.addf %101, %103 : vector<8x512xf32>
    %105 = vector.extract_strided_slice %104 {offsets = [0, 0], sizes = [8, 384], strides = [1, 1]} : vector<8x512xf32> to vector<8x384xf32>
    %106 = arith.negf %105 : vector<8x384xf32>
    %107 = math.exp %106 : vector<8x384xf32>
    %cst_21 = arith.constant 1.000000e+00 : f32
    %108 = vector.broadcast %cst_21 : f32 to vector<8x384xf32>
    %109 = arith.addf %108, %107 : vector<8x384xf32>
    %110 = arith.divf %108, %109 : vector<8x384xf32>
    %111 = vector.extract_strided_slice %104 {offsets = [0, 384], sizes = [8, 128], strides = [1, 1]} : vector<8x512xf32> to vector<8x128xf32>
    %112 = math.tanh %111 : vector<8x128xf32>
    %113 = vector.extract_strided_slice %110 {offsets = [0, 0], sizes = [8, 128], strides = [1, 1]} : vector<8x384xf32> to vector<8x128xf32>
    %114 = vector.extract_strided_slice %110 {offsets = [0, 128], sizes = [8, 128], strides = [1, 1]} : vector<8x384xf32> to vector<8x128xf32>
    %115 = vector.extract_strided_slice %110 {offsets = [0, 256], sizes = [8, 128], strides = [1, 1]} : vector<8x384xf32> to vector<8x128xf32>
    %116 = arith.mulf %114, %96 : vector<8x128xf32>
    %117 = arith.mulf %113, %112 : vector<8x128xf32>
    %118 = arith.addf %116, %117 : vector<8x128xf32>
    %119 = math.tanh %118 : vector<8x128xf32>
    %120 = arith.mulf %115, %119 : vector<8x128xf32>
    %121 = vector.extract_strided_slice %5 {offsets = [40, 0], sizes = [8, 512], strides = [1, 1]} : vector<64x512xf32> to vector<8x512xf32>
    %122 = vector.extract_strided_slice %7 {offsets = [16, 0], sizes = [8, 512], strides = [1, 1]} : vector<64x512xf32> to vector<8x512xf32>
    %123 = arith.addf %121, %122 : vector<8x512xf32>
    %124 = arith.truncf %120 : vector<8x128xf32> to vector<8x128xbf16>
    %cst_22 = arith.constant dense<0.000000e+00> : vector<8x512xf32>
    %125 = tpu.matmul %124, %8, %cst_22 {dimension_numbers = #tpu.dot_dimension_numbers<[1], [0], [0], [1], [0, 0, 1, 1], [], []>} : vector<8x128xbf16>, vector<128x512xbf16>, vector<8x512xf32> -> vector<8x512xf32>
    %126 = arith.addf %123, %125 : vector<8x512xf32>
    %127 = vector.extract_strided_slice %126 {offsets = [0, 0], sizes = [8, 384], strides = [1, 1]} : vector<8x512xf32> to vector<8x384xf32>
    %128 = arith.negf %127 : vector<8x384xf32>
    %129 = math.exp %128 : vector<8x384xf32>
    %cst_23 = arith.constant 1.000000e+00 : f32
    %130 = vector.broadcast %cst_23 : f32 to vector<8x384xf32>
    %131 = arith.addf %130, %129 : vector<8x384xf32>
    %132 = arith.divf %130, %131 : vector<8x384xf32>
    %133 = vector.extract_strided_slice %126 {offsets = [0, 384], sizes = [8, 128], strides = [1, 1]} : vector<8x512xf32> to vector<8x128xf32>
    %134 = math.tanh %133 : vector<8x128xf32>
    %135 = vector.extract_strided_slice %132 {offsets = [0, 0], sizes = [8, 128], strides = [1, 1]} : vector<8x384xf32> to vector<8x128xf32>
    %136 = vector.extract_strided_slice %132 {offsets = [0, 128], sizes = [8, 128], strides = [1, 1]} : vector<8x384xf32> to vector<8x128xf32>
    %137 = vector.extract_strided_slice %132 {offsets = [0, 256], sizes = [8, 128], strides = [1, 1]} : vector<8x384xf32> to vector<8x128xf32>
    %138 = arith.mulf %136, %118 : vector<8x128xf32>
    %139 = arith.mulf %135, %134 : vector<8x128xf32>
    %140 = arith.addf %138, %139 : vector<8x128xf32>
    %141 = math.tanh %140 : vector<8x128xf32>
    %142 = arith.mulf %137, %141 : vector<8x128xf32>
    %143 = vector.extract_strided_slice %5 {offsets = [48, 0], sizes = [8, 512], strides = [1, 1]} : vector<64x512xf32> to vector<8x512xf32>
    %144 = vector.extract_strided_slice %7 {offsets = [8, 0], sizes = [8, 512], strides = [1, 1]} : vector<64x512xf32> to vector<8x512xf32>
    %145 = arith.addf %143, %144 : vector<8x512xf32>
    %146 = arith.truncf %142 : vector<8x128xf32> to vector<8x128xbf16>
    %cst_24 = arith.constant dense<0.000000e+00> : vector<8x512xf32>
    %147 = tpu.matmul %146, %8, %cst_24 {dimension_numbers = #tpu.dot_dimension_numbers<[1], [0], [0], [1], [0, 0, 1, 1], [], []>} : vector<8x128xbf16>, vector<128x512xbf16>, vector<8x512xf32> -> vector<8x512xf32>
    %148 = arith.addf %145, %147 : vector<8x512xf32>
    %149 = vector.extract_strided_slice %148 {offsets = [0, 0], sizes = [8, 384], strides = [1, 1]} : vector<8x512xf32> to vector<8x384xf32>
    %150 = arith.negf %149 : vector<8x384xf32>
    %151 = math.exp %150 : vector<8x384xf32>
    %cst_25 = arith.constant 1.000000e+00 : f32
    %152 = vector.broadcast %cst_25 : f32 to vector<8x384xf32>
    %153 = arith.addf %152, %151 : vector<8x384xf32>
    %154 = arith.divf %152, %153 : vector<8x384xf32>
    %155 = vector.extract_strided_slice %148 {offsets = [0, 384], sizes = [8, 128], strides = [1, 1]} : vector<8x512xf32> to vector<8x128xf32>
    %156 = math.tanh %155 : vector<8x128xf32>
    %157 = vector.extract_strided_slice %154 {offsets = [0, 0], sizes = [8, 128], strides = [1, 1]} : vector<8x384xf32> to vector<8x128xf32>
    %158 = vector.extract_strided_slice %154 {offsets = [0, 128], sizes = [8, 128], strides = [1, 1]} : vector<8x384xf32> to vector<8x128xf32>
    %159 = vector.extract_strided_slice %154 {offsets = [0, 256], sizes = [8, 128], strides = [1, 1]} : vector<8x384xf32> to vector<8x128xf32>
    %160 = arith.mulf %158, %140 : vector<8x128xf32>
    %161 = arith.mulf %157, %156 : vector<8x128xf32>
    %162 = arith.addf %160, %161 : vector<8x128xf32>
    %163 = math.tanh %162 : vector<8x128xf32>
    %164 = arith.mulf %159, %163 : vector<8x128xf32>
    %165 = vector.extract_strided_slice %5 {offsets = [56, 0], sizes = [8, 512], strides = [1, 1]} : vector<64x512xf32> to vector<8x512xf32>
    %166 = vector.extract_strided_slice %7 {offsets = [0, 0], sizes = [8, 512], strides = [1, 1]} : vector<64x512xf32> to vector<8x512xf32>
    %167 = arith.addf %165, %166 : vector<8x512xf32>
    %168 = arith.truncf %164 : vector<8x128xf32> to vector<8x128xbf16>
    %cst_26 = arith.constant dense<0.000000e+00> : vector<8x512xf32>
    %169 = tpu.matmul %168, %8, %cst_26 {dimension_numbers = #tpu.dot_dimension_numbers<[1], [0], [0], [1], [0, 0, 1, 1], [], []>} : vector<8x128xbf16>, vector<128x512xbf16>, vector<8x512xf32> -> vector<8x512xf32>
    %170 = arith.addf %167, %169 : vector<8x512xf32>
    %171 = vector.extract_strided_slice %170 {offsets = [0, 0], sizes = [8, 384], strides = [1, 1]} : vector<8x512xf32> to vector<8x384xf32>
    %172 = arith.negf %171 : vector<8x384xf32>
    %173 = math.exp %172 : vector<8x384xf32>
    %cst_27 = arith.constant 1.000000e+00 : f32
    %174 = vector.broadcast %cst_27 : f32 to vector<8x384xf32>
    %175 = arith.addf %174, %173 : vector<8x384xf32>
    %176 = arith.divf %174, %175 : vector<8x384xf32>
    %177 = vector.extract_strided_slice %170 {offsets = [0, 384], sizes = [8, 128], strides = [1, 1]} : vector<8x512xf32> to vector<8x128xf32>
    %178 = math.tanh %177 : vector<8x128xf32>
    %179 = vector.extract_strided_slice %176 {offsets = [0, 0], sizes = [8, 128], strides = [1, 1]} : vector<8x384xf32> to vector<8x128xf32>
    %180 = vector.extract_strided_slice %176 {offsets = [0, 128], sizes = [8, 128], strides = [1, 1]} : vector<8x384xf32> to vector<8x128xf32>
    %181 = vector.extract_strided_slice %176 {offsets = [0, 256], sizes = [8, 128], strides = [1, 1]} : vector<8x384xf32> to vector<8x128xf32>
    %182 = arith.mulf %180, %162 : vector<8x128xf32>
    %183 = arith.mulf %179, %178 : vector<8x128xf32>
    %184 = arith.addf %182, %183 : vector<8x128xf32>
    %185 = math.tanh %184 : vector<8x128xf32>
    %186 = arith.mulf %181, %185 : vector<8x128xf32>
    %c0_28 = arith.constant 0 : index
    %c0_29 = arith.constant 0 : index
    %187 = vector.load %arg5[%c0_28, %c0_29] : memref<128x128xf32, #tpu.memory_space<vmem>>, vector<128x128xf32>
    %cst_30 = arith.constant dense<0.000000e+00> : vector<8x128xf32>
    %188 = tpu.matmul %186, %187, %cst_30 {dimension_numbers = #tpu.dot_dimension_numbers<[1], [0], [0], [1], [0, 0, 1, 1], [], []>} : vector<8x128xf32>, vector<128x128xf32>, vector<8x128xf32> -> vector<8x128xf32>
    %c0_31 = arith.constant 0 : index
    %c0_32 = arith.constant 0 : index
    %189 = vector.load %arg6[%c0_31, %c0_32] : memref<1x128xf32, #tpu.memory_space<vmem>>, vector<1x128xf32>
    %190 = vector.broadcast %189 : vector<1x128xf32> to vector<8x128xf32>
    %191 = arith.addf %188, %190 : vector<8x128xf32>
    %c0_33 = arith.constant 0 : index
    %c0_34 = arith.constant 0 : index
    %192 = vector.load %arg7[%c0_33, %c0_34] : memref<8x128xf32, #tpu.memory_space<vmem>>, vector<8x128xf32>
    tpu.vector_store %arg7[%c0_33, %c0_34], %191 {strides = array<i32>} : memref<8x128xf32, #tpu.memory_space<vmem>>, vector<8x128xf32>,
    return
  }
}

</mosaic_0001>

<llo_original>
// kernel: sarcasm_forward.1
$region0: #{sarcasm_forward.1}
  #allocation0 [shape = 'u32[]', space=smem, size = 0x4, offset = 0x4, fixed_abs, tag = 'smem constant byte address 0x4 - core index']
  #allocation1 [shape = 'u32[144,128]{1,0:T(1,128)}', space=vmem, size = 0x12000, scoped, tag = 'internal scratch']
  %s0 = inlined_call_operand.vmem [shape: bf16[64,32], index: 0, kind: input, shape index: {}]
  %s1 = inlined_call_operand.vmem [shape: bf16[32,512], index: 1, kind: input, shape index: {}]
  %s2 = inlined_call_operand.hbm [shape: bf16[32,512], index: 2, kind: input, shape index: {}]
  %s3 = inlined_call_operand.vmem [shape: f32[1,512], index: 3, kind: input, shape index: {}]
  %s4 = inlined_call_operand.hbm [shape: bf16[128,512], index: 4, kind: input, shape index: {}]
  %s5 = inlined_call_operand.vmem [shape: f32[128,128], index: 5, kind: input, shape index: {}]
  %s6 = inlined_call_operand.vmem [shape: f32[1,128], index: 6, kind: input, shape index: {}]
  %s7 = inlined_call_operand.vmem [shape: f32[8,128], index: 7, kind: output, shape index: {}]
  %s8 = sld [smem:[#allocation0]]
  $region46: #{sarcasm_forward.1} parent=0
    _
  %s10 = ssub.s32 1, %s8
  %s11 = scalar_select 0, %s10, %s8
  $region1: #{sarcasm_forward.1} parent=0
    #allocation2 [shape = 'u8[32768]{0}', space=vmem, size = 0x8000, scoped, tag = 'input window, operand 2, single buffered']
    #allocation3 [shape = 's32[1]{0}', space=sflag, size = 0x4, scoped, tag = 'scoped memory for sarcasm_forward.1']
    #allocation4 [shape = 'u8[131072]{0}', space=vmem, size = 0x20000, scoped, tag = 'input window, operand 4, single buffered']
    #allocation5 [shape = 's32[1]{0}', space=sflag, size = 0x4, scoped, tag = 'scoped memory for sarcasm_forward.1']
    %12 = vsyncpa [#allocation3], 0
    %13 = vsyncpa [#allocation5], 0
    // Predicated region
    $region2: #{sarcasm_forward.1} parent=1 // pred_check
      _
    $region3: #{sarcasm_forward.1} parent=1 // pred_check_branch
      %15 = sbr.rel (0) target = $region5
    $region4: #{sarcasm_forward.1} parent=1 // pred_region
      _
    $region5: #{sarcasm_forward.1} parent=1 // pred_fallthru
      _
    // Predicated region
    $region6: #{sarcasm_forward.1} parent=1 // pred_check
      _
    $region7: #{sarcasm_forward.1} parent=1 // pred_check_branch
      %17 = sbr.rel (0) target = $region9
    $region8: #{sarcasm_forward.1} parent=1 // pred_region
      _
    $region9: #{sarcasm_forward.1} parent=1 // pred_fallthru
      _
    // Predicated region
    $region10: #{sarcasm_forward.1} parent=1 // pred_check
      _
    $region11: #{sarcasm_forward.1} parent=1 // pred_check_branch
      %19 = sbr.rel (0) target = $region13
    $region12: #{sarcasm_forward.1} parent=1 // pred_region
      %s21 = ssub.s32 1024, 1024
      %22 = vsyncadd [#allocation3], %s21
      %s23 = sshll.u32 [#allocation2], 4
      %s24 = int_to_ptr.vmem [resolvable:$true] %s23
      %29 = dma.hbm_to_vmem [thread:$0]  %s2, 1024, %s24, [#allocation3], 256, 256, 16
    $region13: #{sarcasm_forward.1} parent=1 // pred_fallthru
      _
    // Predicated region
    $region14: #{sarcasm_forward.1} parent=1 // pred_check
      _
    $region15: #{sarcasm_forward.1} parent=1 // pred_check_branch
      %31 = sbr.rel (0) target = $region17
    $region16: #{sarcasm_forward.1} parent=1 // pred_region
      _
    $region17: #{sarcasm_forward.1} parent=1 // pred_fallthru
      _
    // Predicated region
    $region18: #{sarcasm_forward.1} parent=1 // pred_check
      _
    $region19: #{sarcasm_forward.1} parent=1 // pred_check_branch
      %33 = sbr.rel (0) target = $region21
    $region20: #{sarcasm_forward.1} parent=1 // pred_region
      %s35 = ssub.s32 4096, 4096
      %36 = vsyncadd [#allocation5], %s35
      %s37 = sshll.u32 [#allocation4], 4
      %s38 = int_to_ptr.vmem [resolvable:$true] %s37
      %43 = dma.hbm_to_vmem [thread:$0]  %s4, 4096, %s38, [#allocation5], 256, 256, 16
    $region21: #{sarcasm_forward.1} parent=1 // pred_fallthru
      _
    // Predicated region
    $region22: #{sarcasm_forward.1} parent=1 // pred_check
      _
    $region23: #{sarcasm_forward.1} parent=1 // pred_check_branch
      %45 = sbr.rel (0) target = $region25
    $region24: #{sarcasm_forward.1} parent=1 // pred_region
      _
    $region25: #{sarcasm_forward.1} parent=1 // pred_fallthru
      _
    // Predicated region
    $region26: #{sarcasm_forward.1} parent=1 // pred_check
      _
    $region27: #{sarcasm_forward.1} parent=1 // pred_check_branch
      %47 = sbr.rel (0) target = $region29
    $region28: #{sarcasm_forward.1} parent=1 // pred_region
      _
    $region29: #{sarcasm_forward.1} parent=1 // pred_fallthru
      _
    // Predicated region
    $region30: #{sarcasm_forward.1} parent=1 // pred_check
      _
    $region31: #{sarcasm_forward.1} parent=1 // pred_check_branch
      %49 = sbr.rel (0) target = $region33
    $region32: #{sarcasm_forward.1} parent=1 // pred_region
      %50 = dma.done [#allocation3], 1024
    $region33: #{sarcasm_forward.1} parent=1 // pred_fallthru
      _
    // Predicated region
    $region34: #{sarcasm_forward.1} parent=1 // pred_check
      _
    $region35: #{sarcasm_forward.1} parent=1 // pred_check_branch
      %52 = sbr.rel (0) target = $region37
    $region36: #{sarcasm_forward.1} parent=1 // pred_region
      %53 = dma.done [#allocation5], 4096
    $region37: #{sarcasm_forward.1} parent=1 // pred_fallthru
      _
    %v55 = vld [vmem:[%s0] sm:$0xf]
    %v56 = vld [vmem:[%s0 + $0x4] sm:$0xf]
    %v57 = vld [vmem:[%s0 + $0x8] sm:$0xf]
    %v58 = vld [vmem:[%s0 + $0xc] sm:$0xf]
    %v59 = vld [vmem:[%s0 + $0x10] sm:$0xf]
    %v60 = vld [vmem:[%s0 + $0x14] sm:$0xf]
    %v61 = vld [vmem:[%s0 + $0x18] sm:$0xf]
    %v62 = vld [vmem:[%s0 + $0x1c] sm:$0xf]
    %v63 = vld [vmem:[%s3] sm:$0xf]
    %v64 = vld [vmem:[%s1] sm:$0xff]
    %v65 = vld [vmem:[%s1 + $0x8] sm:$0xff]
    %v66 = vld [vmem:[%s1 + $0x10] sm:$0xff]
    %v67 = vld [vmem:[%s1 + $0x18] sm:$0xff]
    %v68 = vld [vmem:[%s1 + $0x20] sm:$0xff]
    %v69 = vld [vmem:[%s1 + $0x28] sm:$0xff]
    %v70 = vld [vmem:[%s1 + $0x30] sm:$0xff]
    %v71 = vld [vmem:[%s1 + $0x38] sm:$0xff]
    %v73 = vlaneseq
    %v74 = vshrl.u32 %v73, 7
    %v75 = vsub.s32 0, %v74
    %v76 = vrot.slane %v63, %v75
    %v77 = vlaneseq
    %v78 = vshrl.u32 %v77, 7
    %v79 = vsub.s32 1, %v78
    %v80 = vrot.slane %v63, %v79
    %v81 = vlaneseq
    %v82 = vshrl.u32 %v81, 7
    %v83 = vsub.s32 2, %v82
    %v84 = vrot.slane %v63, %v83
    %v85 = vlaneseq
    %v86 = vshrl.u32 %v85, 7
    %v87 = vsub.s32 3, %v86
    %v88 = vrot.slane %v63, %v87
    %v101 = vunpack.c.l.b16 %v55
    %v102 = vunpack.c.l.b16 %v56
    %v103 = vunpack.c.l.b16 %v57
    %v104 = vunpack.c.l.b16 %v58
    %v105 = vunpack.c.l.b16 %v59
    %v106 = vunpack.c.l.b16 %v60
    %v107 = vunpack.c.l.b16 %v61
    %v108 = vunpack.c.l.b16 %v62
    %v109 = vpack.c.b16 %v102, %v101
    %v110 = vpack.c.b16 %v104, %v103
    %v111 = vpack.c.b16 %v106, %v105
    %v112 = vpack.c.b16 %v108, %v107
    %v121 = vunpack.c.l.b16 %v64
    %v122 = vunpack.c.h.b16 %v64
    %v123 = vunpack.c.l.b16 %v65
    %v124 = vunpack.c.h.b16 %v65
    %v125 = vunpack.c.l.b16 %v66
    %v126 = vunpack.c.h.b16 %v66
    %v127 = vunpack.c.l.b16 %v67
    %v128 = vunpack.c.h.b16 %v67
    %v129 = vunpack.c.l.b16 %v68
    %v130 = vunpack.c.h.b16 %v68
    %v131 = vunpack.c.l.b16 %v69
    %v132 = vunpack.c.h.b16 %v69
    %v133 = vunpack.c.l.b16 %v70
    %v134 = vunpack.c.h.b16 %v70
    %v135 = vunpack.c.l.b16 %v71
    %v136 = vunpack.c.h.b16 %v71
    %v137 = vpack.c.b16 %v125, %v121
    %v138 = vpack.c.b16 %v126, %v122
    %v139 = vpack.c.b16 %v127, %v123
    %v140 = vpack.c.b16 %v128, %v124
    %v141 = vpack.c.b16 %v133, %v129
    %v142 = vpack.c.b16 %v134, %v130
    %v143 = vpack.c.b16 %v135, %v131
    %v144 = vpack.c.b16 %v136, %v132
    %vm153 = vcmask 261120
    %v155 = vsel %vm153, %v109, 0
    %v158 = vsel %vm153, %v110, 0
    %v161 = vsel %vm153, %v111, 0
    %v164 = vsel %vm153, %v112, 0
    %166 = vmatprep.subr.bf16.mxu0 %v138
    %167 = vmatpush1.bf16.msra.mxu0 %v137
    %168 = vmatprep.subr.bf16.mxu0 %v142
    %169 = vmatpush1.bf16.msra.mxu0 %v141
    %170 = vmatprep.subr.bf16.mxu0 0
    %171 = vmatpush1.bf16.msra.mxu0 0
    %172 = vmatprep.subr.bf16.mxu0 0
    %173 = vmatpush1.bf16.msra.mxu0 0
    %174 = vmatprep.subr.bf16.mxu0 0
    %175 = vmatpush1.bf16.msra.mxu0 0
    %176 = vmatprep.subr.bf16.mxu0 0
    %177 = vmatpush1.bf16.msra.mxu0 0
    %178 = vmatprep.subr.bf16.mxu0 0
    %179 = vmatpush1.bf16.msra.mxu0 0
    %180 = vmatprep.subr.bf16.mxu0 0
    %181 = vmatpush1.bf16.msra.mxu0 0
    %182 = vmatprep.subr.bf16.mxu0 0
    %183 = vmatpush1.bf16.msra.mxu0 0
    %184 = vmatprep.subr.bf16.mxu0 0
    %185 = vmatpush1.bf16.msra.mxu0 0
    %186 = vmatprep.subr.bf16.mxu0 0
    %187 = vmatpush1.bf16.msra.mxu0 0
    %188 = vmatprep.subr.bf16.mxu0 0
    %189 = vmatpush1.bf16.msra.mxu0 0
    %190 = vmatprep.subr.bf16.mxu0 0
    %191 = vmatpush1.bf16.msra.mxu0 0
    %192 = vmatprep.subr.bf16.mxu0 0
    %193 = vmatpush1.bf16.msra.mxu0 0
    %194 = vmatprep.subr.bf16.mxu0 0
    %195 = vmatpush1.bf16.msra.mxu0 0
    %196 = vmatprep.subr.bf16.mxu0 0
    %197 = vmatpush1.bf16.msra.mxu0 0
    %198 = vmatprep.mubr.bf16.mxu0 0
    %199 = vmatmul.mubr.bf16.gmra.mrb[0].mxu0 %v155
    %v200 = vpop.f32.mrb[0].mxu0
    %v201 = vadd.f32 %v76, %v200
    %v202 = vpop.f32.mrb[0].mxu0
    %v203 = vadd.f32 %v80, %v202
    %v204 = vpop.f32.mrb[0].mxu0
    %v205 = vadd.f32 %v76, %v204
    %v206 = vpop.f32.mrb[0].mxu0
    %v207 = vadd.f32 %v80, %v206
    %208 = vmatprep.mubr.bf16.mxu0 0
    %209 = vmatmul.mubr.bf16.gmra.mrb[0].mxu0 %v158
    %v210 = vpop.f32.mrb[0].mxu0
    %v211 = vadd.f32 %v76, %v210
    %v212 = vpop.f32.mrb[0].mxu0
    %v213 = vadd.f32 %v80, %v212
    %v214 = vpop.f32.mrb[0].mxu0
    %v215 = vadd.f32 %v76, %v214
    %v216 = vpop.f32.mrb[0].mxu0
    %v217 = vadd.f32 %v80, %v216
    %218 = vmatprep.mubr.bf16.mxu0 0
    %219 = vmatmul.mubr.bf16.gmra.mrb[0].mxu0 %v161
    %v220 = vpop.f32.mrb[0].mxu0
    %v221 = vadd.f32 %v76, %v220
    %v222 = vpop.f32.mrb[0].mxu0
    %v223 = vadd.f32 %v80, %v222
    %v224 = vpop.f32.mrb[0].mxu0
    %v225 = vadd.f32 %v76, %v224
    %v226 = vpop.f32.mrb[0].mxu0
    %v227 = vadd.f32 %v80, %v226
    %228 = vmatprep.mubr.bf16.mxu0 0
    %229 = vmatmul.mubr.bf16.gmra.mrb[0].mxu0 %v164
    %v230 = vpop.f32.mrb[0].mxu0
    %v231 = vadd.f32 %v76, %v230
    %v232 = vpop.f32.mrb[0].mxu0
    %v233 = vadd.f32 %v80, %v232
    %v234 = vpop.f32.mrb[0].mxu0
    %v235 = vadd.f32 %v76, %v234
    %v236 = vpop.f32.mrb[0].mxu0
    %v237 = vadd.f32 %v80, %v236
    %238 = vdwg.mxu0
    %239 = vmatprep.subr.bf16.mxu0 %v140
    %240 = vmatpush1.bf16.msra.mxu0 %v139
    %241 = vmatprep.subr.bf16.mxu0 %v144
    %242 = vmatpush1.bf16.msra.mxu0 %v143
    %243 = vmatprep.subr.bf16.mxu0 0
    %244 = vmatpush1.bf16.msra.mxu0 0
    %245 = vmatprep.subr.bf16.mxu0 0
    %246 = vmatpush1.bf16.msra.mxu0 0
    %247 = vmatprep.subr.bf16.mxu0 0
    %248 = vmatpush1.bf16.msra.mxu0 0
    %249 = vmatprep.subr.bf16.mxu0 0
    %250 = vmatpush1.bf16.msra.mxu0 0
    %251 = vmatprep.subr.bf16.mxu0 0
    %252 = vmatpush1.bf16.msra.mxu0 0
    %253 = vmatprep.subr.bf16.mxu0 0
    %254 = vmatpush1.bf16.msra.mxu0 0
    %255 = vmatprep.subr.bf16.mxu0 0
    %256 = vmatpush1.bf16.msra.mxu0 0
    %257 = vmatprep.subr.bf16.mxu0 0
    %258 = vmatpush1.bf16.msra.mxu0 0
    %259 = vmatprep.subr.bf16.mxu0 0
    %260 = vmatpush1.bf16.msra.mxu0 0
    %261 = vmatprep.subr.bf16.mxu0 0
    %262 = vmatpush1.bf16.msra.mxu0 0
    %263 = vmatprep.subr.bf16.mxu0 0
    %264 = vmatpush1.bf16.msra.mxu0 0
    %265 = vmatprep.subr.bf16.mxu0 0
    %266 = vmatpush1.bf16.msra.mxu0 0
    %267 = vmatprep.subr.bf16.mxu0 0
    %268 = vmatpush1.bf16.msra.mxu0 0
    %269 = vmatprep.subr.bf16.mxu0 0
    %270 = vmatpush1.bf16.msra.mxu0 0
    %271 = vmatprep.mubr.bf16.mxu0 0
    %272 = vmatmul.mubr.bf16.gmra.mrb[0].mxu0 %v155
    %v273 = vpop.f32.mrb[0].mxu0
    %v274 = vadd.f32 %v84, %v273
    %v275 = vpop.f32.mrb[0].mxu0
    %v276 = vadd.f32 %v88, %v275
    %v277 = vpop.f32.mrb[0].mxu0
    %v278 = vadd.f32 %v84, %v277
    %v279 = vpop.f32.mrb[0].mxu0
    %v280 = vadd.f32 %v88, %v279
    %281 = vmatprep.mubr.bf16.mxu0 0
    %282 = vmatmul.mubr.bf16.gmra.mrb[0].mxu0 %v158
    %v283 = vpop.f32.mrb[0].mxu0
    %v284 = vadd.f32 %v84, %v283
    %v285 = vpop.f32.mrb[0].mxu0
    %v286 = vadd.f32 %v88, %v285
    %v287 = vpop.f32.mrb[0].mxu0
    %v288 = vadd.f32 %v84, %v287
    %v289 = vpop.f32.mrb[0].mxu0
    %v290 = vadd.f32 %v88, %v289
    %291 = vmatprep.mubr.bf16.mxu0 0
    %292 = vmatmul.mubr.bf16.gmra.mrb[0].mxu0 %v161
    %v293 = vpop.f32.mrb[0].mxu0
    %v294 = vadd.f32 %v84, %v293
    %v295 = vpop.f32.mrb[0].mxu0
    %v296 = vadd.f32 %v88, %v295
    %v297 = vpop.f32.mrb[0].mxu0
    %v298 = vadd.f32 %v84, %v297
    %v299 = vpop.f32.mrb[0].mxu0
    %v300 = vadd.f32 %v88, %v299
    %301 = vmatprep.mubr.bf16.mxu0 0
    %302 = vmatmul.mubr.bf16.gmra.mrb[0].mxu0 %v164
    %v303 = vpop.f32.mrb[0].mxu0
    %v304 = vadd.f32 %v84, %v303
    %v305 = vpop.f32.mrb[0].mxu0
    %v306 = vadd.f32 %v88, %v305
    %v307 = vpop.f32.mrb[0].mxu0
    %v308 = vadd.f32 %v84, %v307
    %v309 = vpop.f32.mrb[0].mxu0
    %v310 = vadd.f32 %v88, %v309
    %311 = vdwg.mxu0
    %v312 = vld [vmem:[#allocation2] sm:$0xff]
    %v313 = vld [vmem:[#allocation2 + $0x8] sm:$0xff]
    %v314 = vld [vmem:[#allocation2 + $0x10] sm:$0xff]
    %v315 = vld [vmem:[#allocation2 + $0x18] sm:$0xff]
    %v316 = vld [vmem:[#allocation2 + $0x20] sm:$0xff]
    %v317 = vld [vmem:[#allocation2 + $0x28] sm:$0xff]
    %v318 = vld [vmem:[#allocation2 + $0x30] sm:$0xff]
    %v319 = vld [vmem:[#allocation2 + $0x38] sm:$0xff]
    %v328 = vunpack.c.l.b16 %v312
    %v329 = vunpack.c.h.b16 %v312
    %v330 = vunpack.c.l.b16 %v313
    %v331 = vunpack.c.h.b16 %v313
    %v332 = vunpack.c.l.b16 %v314
    %v333 = vunpack.c.h.b16 %v314
    %v334 = vunpack.c.l.b16 %v315
    %v335 = vunpack.c.h.b16 %v315
    %v336 = vunpack.c.l.b16 %v316
    %v337 = vunpack.c.h.b16 %v316
    %v338 = vunpack.c.l.b16 %v317
    %v339 = vunpack.c.h.b16 %v317
    %v340 = vunpack.c.l.b16 %v318
    %v341 = vunpack.c.h.b16 %v318
    %v342 = vunpack.c.l.b16 %v319
    %v343 = vunpack.c.h.b16 %v319
    %v344 = vpack.c.b16 %v332, %v328
    %v345 = vpack.c.b16 %v333, %v329
    %v346 = vpack.c.b16 %v334, %v330
    %v347 = vpack.c.b16 %v335, %v331
    %v348 = vpack.c.b16 %v340, %v336
    %v349 = vpack.c.b16 %v341, %v337
    %v350 = vpack.c.b16 %v342, %v338
    %v351 = vpack.c.b16 %v343, %v339
    %360 = vmatprep.subr.bf16.mxu0 %v345
    %361 = vmatpush1.bf16.msra.mxu0 %v344
    %362 = vmatprep.subr.bf16.mxu0 %v349
    %363 = vmatpush1.bf16.msra.mxu0 %v348
    %364 = vmatprep.subr.bf16.mxu0 0
    %365 = vmatpush1.bf16.msra.mxu0 0
    %366 = vmatprep.subr.bf16.mxu0 0
    %367 = vmatpush1.bf16.msra.mxu0 0
    %368 = vmatprep.subr.bf16.mxu0 0
    %369 = vmatpush1.bf16.msra.mxu0 0
    %370 = vmatprep.subr.bf16.mxu0 0
    %371 = vmatpush1.bf16.msra.mxu0 0
    %372 = vmatprep.subr.bf16.mxu0 0
    %373 = vmatpush1.bf16.msra.mxu0 0
    %374 = vmatprep.subr.bf16.mxu0 0
    %375 = vmatpush1.bf16.msra.mxu0 0
    %376 = vmatprep.subr.bf16.mxu0 0
    %377 = vmatpush1.bf16.msra.mxu0 0
    %378 = vmatprep.subr.bf16.mxu0 0
    %379 = vmatpush1.bf16.msra.mxu0 0
    %380 = vmatprep.subr.bf16.mxu0 0
    %381 = vmatpush1.bf16.msra.mxu0 0
    %382 = vmatprep.subr.bf16.mxu0 0
    %383 = vmatpush1.bf16.msra.mxu0 0
    %384 = vmatprep.subr.bf16.mxu0 0
    %385 = vmatpush1.bf16.msra.mxu0 0
    %386 = vmatprep.subr.bf16.mxu0 0
    %387 = vmatpush1.bf16.msra.mxu0 0
    %388 = vmatprep.subr.bf16.mxu0 0
    %389 = vmatpush1.bf16.msra.mxu0 0
    %390 = vmatprep.subr.bf16.mxu0 0
    %391 = vmatpush1.bf16.msra.mxu0 0
    %392 = vmatprep.mubr.bf16.mxu0 0
    %393 = vmatmul.mubr.bf16.gmra.mrb[0].mxu0 %v155
    %v394 = vpop.f32.mrb[0].mxu0
    %v395 = vadd.f32 0.0, %v394
    %v396 = vpop.f32.mrb[0].mxu0
    %v397 = vadd.f32 0.0, %v396
    %v398 = vpop.f32.mrb[0].mxu0
    %v399 = vadd.f32 0.0, %v398
    %v400 = vpop.f32.mrb[0].mxu0
    %v401 = vadd.f32 0.0, %v400
    %402 = vmatprep.mubr.bf16.mxu0 0
    %403 = vmatmul.mubr.bf16.gmra.mrb[0].mxu0 %v158
    %v404 = vpop.f32.mrb[0].mxu0
    %v405 = vadd.f32 0.0, %v404
    %v406 = vpop.f32.mrb[0].mxu0
    %v407 = vadd.f32 0.0, %v406
    %v408 = vpop.f32.mrb[0].mxu0
    %v409 = vadd.f32 0.0, %v408
    %v410 = vpop.f32.mrb[0].mxu0
    %v411 = vadd.f32 0.0, %v410
    %412 = vmatprep.mubr.bf16.mxu0 0
    %413 = vmatmul.mubr.bf16.gmra.mrb[0].mxu0 %v161
    %v414 = vpop.f32.mrb[0].mxu0
    %v415 = vadd.f32 0.0, %v414
    %v416 = vpop.f32.mrb[0].mxu0
    %v417 = vadd.f32 0.0, %v416
    %v418 = vpop.f32.mrb[0].mxu0
    %v419 = vadd.f32 0.0, %v418
    %v420 = vpop.f32.mrb[0].mxu0
    %v421 = vadd.f32 0.0, %v420
    %422 = vmatprep.mubr.bf16.mxu0 0
    %423 = vmatmul.mubr.bf16.gmra.mrb[0].mxu0 %v164
    %v424 = vpop.f32.mrb[0].mxu0
    %v425 = vadd.f32 0.0, %v424
    %v426 = vpop.f32.mrb[0].mxu0
    %v427 = vadd.f32 0.0, %v426
    %v428 = vpop.f32.mrb[0].mxu0
    %v429 = vadd.f32 0.0, %v428
    %v430 = vpop.f32.mrb[0].mxu0
    %v431 = vadd.f32 0.0, %v430
    %432 = vdwg.mxu0
    %433 = vmatprep.subr.bf16.mxu0 %v347
    %434 = vmatpush1.bf16.msra.mxu0 %v346
    %435 = vmatprep.subr.bf16.mxu0 %v351
    %436 = vmatpush1.bf16.msra.mxu0 %v350
    %437 = vmatprep.subr.bf16.mxu0 0
    %438 = vmatpush1.bf16.msra.mxu0 0
    %439 = vmatprep.subr.bf16.mxu0 0
    %440 = vmatpush1.bf16.msra.mxu0 0
    %441 = vmatprep.subr.bf16.mxu0 0
    %442 = vmatpush1.bf16.msra.mxu0 0
    %443 = vmatprep.subr.bf16.mxu0 0
    %444 = vmatpush1.bf16.msra.mxu0 0
    %445 = vmatprep.subr.bf16.mxu0 0
    %446 = vmatpush1.bf16.msra.mxu0 0
    %447 = vmatprep.subr.bf16.mxu0 0
    %448 = vmatpush1.bf16.msra.mxu0 0
    %449 = vmatprep.subr.bf16.mxu0 0
    %450 = vmatpush1.bf16.msra.mxu0 0
    %451 = vmatprep.subr.bf16.mxu0 0
    %452 = vmatpush1.bf16.msra.mxu0 0
    %453 = vmatprep.subr.bf16.mxu0 0
    %454 = vmatpush1.bf16.msra.mxu0 0
    %455 = vmatprep.subr.bf16.mxu0 0
    %456 = vmatpush1.bf16.msra.mxu0 0
    %457 = vmatprep.subr.bf16.mxu0 0
    %458 = vmatpush1.bf16.msra.mxu0 0
    %459 = vmatprep.subr.bf16.mxu0 0
    %460 = vmatpush1.bf16.msra.mxu0 0
    %461 = vmatprep.subr.bf16.mxu0 0
    %462 = vmatpush1.bf16.msra.mxu0 0
    %463 = vmatprep.subr.bf16.mxu0 0
    %464 = vmatpush1.bf16.msra.mxu0 0
    %465 = vmatprep.mubr.bf16.mxu0 0
    %466 = vmatmul.mubr.bf16.gmra.mrb[0].mxu0 %v155
    %v467 = vpop.f32.mrb[0].mxu0
    %v468 = vadd.f32 0.0, %v467
    %v469 = vpop.f32.mrb[0].mxu0
    %v470 = vadd.f32 0.0, %v469
    %v471 = vpop.f32.mrb[0].mxu0
    %v472 = vadd.f32 0.0, %v471
    %v473 = vpop.f32.mrb[0].mxu0
    %v474 = vadd.f32 0.0, %v473
    %475 = vmatprep.mubr.bf16.mxu0 0
    %476 = vmatmul.mubr.bf16.gmra.mrb[0].mxu0 %v158
    %v477 = vpop.f32.mrb[0].mxu0
    %v478 = vadd.f32 0.0, %v477
    %v479 = vpop.f32.mrb[0].mxu0
    %v480 = vadd.f32 0.0, %v479
    %v481 = vpop.f32.mrb[0].mxu0
    %v482 = vadd.f32 0.0, %v481
    %v483 = vpop.f32.mrb[0].mxu0
    %v484 = vadd.f32 0.0, %v483
    %485 = vmatprep.mubr.bf16.mxu0 0
    %486 = vmatmul.mubr.bf16.gmra.mrb[0].mxu0 %v161
    %v487 = vpop.f32.mrb[0].mxu0
    %v488 = vadd.f32 0.0, %v487
    %v489 = vpop.f32.mrb[0].mxu0
    %v490 = vadd.f32 0.0, %v489
    %v491 = vpop.f32.mrb[0].mxu0
    %v492 = vadd.f32 0.0, %v491
    %v493 = vpop.f32.mrb[0].mxu0
    %v494 = vadd.f32 0.0, %v493
    %495 = vmatprep.mubr.bf16.mxu0 0
    %496 = vmatmul.mubr.bf16.gmra.mrb[0].mxu0 %v164
    %v497 = vpop.f32.mrb[0].mxu0
    %v498 = vadd.f32 0.0, %v497
    %v499 = vpop.f32.mrb[0].mxu0
    %v500 = vadd.f32 0.0, %v499
    %v501 = vpop.f32.mrb[0].mxu0
    %v502 = vadd.f32 0.0, %v501
    %v503 = vpop.f32.mrb[0].mxu0
    %v504 = vadd.f32 0.0, %v503
    %505 = vdwg.mxu0
    %v506 = vld [vmem:[#allocation4] sm:$0xff]
    %v507 = vld [vmem:[#allocation4 + $0x8] sm:$0xff]
    %v508 = vld [vmem:[#allocation4 + $0x10] sm:$0xff]
    %v509 = vld [vmem:[#allocation4 + $0x18] sm:$0xff]
    %v510 = vld [vmem:[#allocation4 + $0x20] sm:$0xff]
    %v511 = vld [vmem:[#allocation4 + $0x28] sm:$0xff]
    %v512 = vld [vmem:[#allocation4 + $0x30] sm:$0xff]
    %v513 = vld [vmem:[#allocation4 + $0x38] sm:$0xff]
    %v514 = vld [vmem:[#allocation4 + $0x40] sm:$0xff]
    %v515 = vld [vmem:[#allocation4 + $0x48] sm:$0xff]
    %v516 = vld [vmem:[#allocation4 + $0x50] sm:$0xff]
    %v517 = vld [vmem:[#allocation4 + $0x58] sm:$0xff]
    %v518 = vld [vmem:[#allocation4 + $0x60] sm:$0xff]
    %v519 = vld [vmem:[#allocation4 + $0x68] sm:$0xff]
    %v520 = vld [vmem:[#allocation4 + $0x70] sm:$0xff]
    %v521 = vld [vmem:[#allocation4 + $0x78] sm:$0xff]
    %v522 = vld [vmem:[#allocation4 + $0x80] sm:$0xff]
    %v523 = vld [vmem:[#allocation4 + $0x88] sm:$0xff]
    %v524 = vld [vmem:[#allocation4 + $0x90] sm:$0xff]
    %v525 = vld [vmem:[#allocation4 + $0x98] sm:$0xff]
    %v526 = vld [vmem:[#allocation4 + $0xa0] sm:$0xff]
    %v527 = vld [vmem:[#allocation4 + $0xa8] sm:$0xff]
    %v528 = vld [vmem:[#allocation4 + $0xb0] sm:$0xff]
    %v529 = vld [vmem:[#allocation4 + $0xb8] sm:$0xff]
    %v530 = vld [vmem:[#allocation4 + $0xc0] sm:$0xff]
    %v531 = vld [vmem:[#allocation4 + $0xc8] sm:$0xff]
    %v532 = vld [vmem:[#allocation4 + $0xd0] sm:$0xff]
    %v533 = vld [vmem:[#allocation4 + $0xd8] sm:$0xff]
    %v534 = vld [vmem:[#allocation4 + $0xe0] sm:$0xff]
    %v535 = vld [vmem:[#allocation4 + $0xe8] sm:$0xff]
    %v536 = vld [vmem:[#allocation4 + $0xf0] sm:$0xff]
    %v537 = vld [vmem:[#allocation4 + $0xf8] sm:$0xff]
    %v538 = vadd.f32 %v201, %v429
    %v539 = vadd.f32 %v203, %v431
    %v540 = vadd.f32 %v274, %v502
    %v541 = vadd.f32 %v276, %v504
    %v574 = vunpack.c.l.b16 %v506
    %v575 = vunpack.c.h.b16 %v506
    %v576 = vunpack.c.l.b16 %v507
    %v577 = vunpack.c.h.b16 %v507
    %v578 = vunpack.c.l.b16 %v508
    %v579 = vunpack.c.h.b16 %v508
    %v580 = vunpack.c.l.b16 %v509
    %v581 = vunpack.c.h.b16 %v509
    %v582 = vunpack.c.l.b16 %v510
    %v583 = vunpack.c.h.b16 %v510
    %v584 = vunpack.c.l.b16 %v511
    %v585 = vunpack.c.h.b16 %v511
    %v586 = vunpack.c.l.b16 %v512
    %v587 = vunpack.c.h.b16 %v512
    %v588 = vunpack.c.l.b16 %v513
    %v589 = vunpack.c.h.b16 %v513
    %v590 = vunpack.c.l.b16 %v514
    %v591 = vunpack.c.h.b16 %v514
    %v592 = vunpack.c.l.b16 %v515
    %v593 = vunpack.c.h.b16 %v515
    %v594 = vunpack.c.l.b16 %v516
    %v595 = vunpack.c.h.b16 %v516
    %v596 = vunpack.c.l.b16 %v517
    %v597 = vunpack.c.h.b16 %v517
    %v598 = vunpack.c.l.b16 %v518
    %v599 = vunpack.c.h.b16 %v518
    %v600 = vunpack.c.l.b16 %v519
    %v601 = vunpack.c.h.b16 %v519
    %v602 = vunpack.c.l.b16 %v520
    %v603 = vunpack.c.h.b16 %v520
    %v604 = vunpack.c.l.b16 %v521
    %v605 = vunpack.c.h.b16 %v521
    %v606 = vunpack.c.l.b16 %v522
    %v607 = vunpack.c.h.b16 %v522
    %v608 = vunpack.c.l.b16 %v523
    %v609 = vunpack.c.h.b16 %v523
    %v610 = vunpack.c.l.b16 %v524
    %v611 = vunpack.c.h.b16 %v524
    %v612 = vunpack.c.l.b16 %v525
    %v613 = vunpack.c.h.b16 %v525
    %v614 = vunpack.c.l.b16 %v526
    %v615 = vunpack.c.h.b16 %v526
    %v616 = vunpack.c.l.b16 %v527
    %v617 = vunpack.c.h.b16 %v527
    %v618 = vunpack.c.l.b16 %v528
    %v619 = vunpack.c.h.b16 %v528
    %v620 = vunpack.c.l.b16 %v529
    %v621 = vunpack.c.h.b16 %v529
    %v622 = vunpack.c.l.b16 %v530
    %v623 = vunpack.c.h.b16 %v530
    %v624 = vunpack.c.l.b16 %v531
    %v625 = vunpack.c.h.b16 %v531
    %v626 = vunpack.c.l.b16 %v532
    %v627 = vunpack.c.h.b16 %v532
    %v628 = vunpack.c.l.b16 %v533
    %v629 = vunpack.c.h.b16 %v533
    %v630 = vunpack.c.l.b16 %v534
    %v631 = vunpack.c.h.b16 %v534
    %v632 = vunpack.c.l.b16 %v535
    %v633 = vunpack.c.h.b16 %v535
    %v634 = vunpack.c.l.b16 %v536
    %v635 = vunpack.c.h.b16 %v536
    %v636 = vunpack.c.l.b16 %v537
    %v637 = vunpack.c.h.b16 %v537
    %v638 = vpack.c.b16 %v578, %v574
    %v639 = vpack.c.b16 %v579, %v575
    %v640 = vpack.c.b16 %v580, %v576
    %v641 = vpack.c.b16 %v581, %v577
    %v642 = vpack.c.b16 %v586, %v582
    %v643 = vpack.c.b16 %v587, %v583
    %v644 = vpack.c.b16 %v588, %v584
    %v645 = vpack.c.b16 %v589, %v585
    %v646 = vpack.c.b16 %v594, %v590
    %v647 = vpack.c.b16 %v595, %v591
    %v648 = vpack.c.b16 %v596, %v592
    %v649 = vpack.c.b16 %v597, %v593
    %v650 = vpack.c.b16 %v602, %v598
    %v651 = vpack.c.b16 %v603, %v599
    %v652 = vpack.c.b16 %v604, %v600
    %v653 = vpack.c.b16 %v605, %v601
    %v654 = vpack.c.b16 %v610, %v606
    %v655 = vpack.c.b16 %v611, %v607
    %v656 = vpack.c.b16 %v612, %v608
    %v657 = vpack.c.b16 %v613, %v609
    %v658 = vpack.c.b16 %v618, %v614
    %v659 = vpack.c.b16 %v619, %v615
    %v660 = vpack.c.b16 %v620, %v616
    %v661 = vpack.c.b16 %v621, %v617
    %v662 = vpack.c.b16 %v626, %v622
    %v663 = vpack.c.b16 %v627, %v623
    %v664 = vpack.c.b16 %v628, %v624
    %v665 = vpack.c.b16 %v629, %v625
    %v666 = vpack.c.b16 %v634, %v630
    %v667 = vpack.c.b16 %v635, %v631
    %v668 = vpack.c.b16 %v636, %v632
    %v669 = vpack.c.b16 %v637, %v633
    %702 = vmatprep.subr.bf16.mxu0 %v639
    %703 = vmatpush1.bf16.msra.mxu0 %v638
    %704 = vmatprep.subr.bf16.mxu0 %v643
    %705 = vmatpush1.bf16.msra.mxu0 %v642
    %706 = vmatprep.subr.bf16.mxu0 %v647
    %707 = vmatpush1.bf16.msra.mxu0 %v646
    %708 = vmatprep.subr.bf16.mxu0 %v651
    %709 = vmatpush1.bf16.msra.mxu0 %v650
    %710 = vmatprep.subr.bf16.mxu0 %v655
    %711 = vmatpush1.bf16.msra.mxu0 %v654
    %712 = vmatprep.subr.bf16.mxu0 %v659
    %713 = vmatpush1.bf16.msra.mxu0 %v658
    %714 = vmatprep.subr.bf16.mxu0 %v663
    %715 = vmatpush1.bf16.msra.mxu0 %v662
    %716 = vmatprep.subr.bf16.mxu0 %v667
    %717 = vmatpush1.bf16.msra.mxu0 %v666
    %718 = vmatprep.subr.bf16.mxu0 0
    %719 = vmatpush1.bf16.msra.mxu0 0
    %720 = vmatprep.subr.bf16.mxu0 0
    %721 = vmatpush1.bf16.msra.mxu0 0
    %722 = vmatprep.subr.bf16.mxu0 0
    %723 = vmatpush1.bf16.msra.mxu0 0
    %724 = vmatprep.subr.bf16.mxu0 0
    %725 = vmatpush1.bf16.msra.mxu0 0
    %726 = vmatprep.subr.bf16.mxu0 0
    %727 = vmatpush1.bf16.msra.mxu0 0
    %728 = vmatprep.subr.bf16.mxu0 0
    %729 = vmatpush1.bf16.msra.mxu0 0
    %730 = vmatprep.subr.bf16.mxu0 0
    %731 = vmatpush1.bf16.msra.mxu0 0
    %732 = vmatprep.subr.bf16.mxu0 0
    %733 = vmatpush1.bf16.msra.mxu0 0
    %734 = vmatprep.mubr.bf16.mxu0 0
    %735 = vmatmul.mubr.bf16.gmra.mrb[0].mxu0 0
    %v736 = vpop.f32.mrb[0].mxu0
    %v737 = vadd.f32 0.0, %v736
    %v738 = vpop.f32.mrb[0].mxu0
    %v739 = vadd.f32 0.0, %v738
    %v740 = vpop.f32.mrb[0].mxu0
    %v741 = vpop.f32.mrb[0].mxu0
    %742 = vdwg.mxu0
    %743 = vmatprep.subr.bf16.mxu0 %v641
    %744 = vmatpush1.bf16.msra.mxu0 %v640
    %745 = vmatprep.subr.bf16.mxu0 %v645
    %746 = vmatpush1.bf16.msra.mxu0 %v644
    %747 = vmatprep.subr.bf16.mxu0 %v649
    %748 = vmatpush1.bf16.msra.mxu0 %v648
    %749 = vmatprep.subr.bf16.mxu0 %v653
    %750 = vmatpush1.bf16.msra.mxu0 %v652
    %751 = vmatprep.subr.bf16.mxu0 %v657
    %752 = vmatpush1.bf16.msra.mxu0 %v656
    %753 = vmatprep.subr.bf16.mxu0 %v661
    %754 = vmatpush1.bf16.msra.mxu0 %v660
    %755 = vmatprep.subr.bf16.mxu0 %v665
    %756 = vmatpush1.bf16.msra.mxu0 %v664
    %757 = vmatprep.subr.bf16.mxu0 %v669
    %758 = vmatpush1.bf16.msra.mxu0 %v668
    %759 = vmatprep.subr.bf16.mxu0 0
    %760 = vmatpush1.bf16.msra.mxu0 0
    %761 = vmatprep.subr.bf16.mxu0 0
    %762 = vmatpush1.bf16.msra.mxu0 0
    %763 = vmatprep.subr.bf16.mxu0 0
    %764 = vmatpush1.bf16.msra.mxu0 0
    %765 = vmatprep.subr.bf16.mxu0 0
    %766 = vmatpush1.bf16.msra.mxu0 0
    %767 = vmatprep.subr.bf16.mxu0 0
    %768 = vmatpush1.bf16.msra.mxu0 0
    %769 = vmatprep.subr.bf16.mxu0 0
    %770 = vmatpush1.bf16.msra.mxu0 0
    %771 = vmatprep.subr.bf16.mxu0 0
    %772 = vmatpush1.bf16.msra.mxu0 0
    %773 = vmatprep.subr.bf16.mxu0 0
    %774 = vmatpush1.bf16.msra.mxu0 0
    %775 = vmatprep.mubr.bf16.mxu0 0
    %776 = vmatmul.mubr.bf16.gmra.mrb[0].mxu0 0
    %v777 = vpop.f32.mrb[0].mxu0
    %v778 = vadd.f32 0.0, %v777
    %v779 = vpop.f32.mrb[0].mxu0
    %v780 = vadd.f32 0.0, %v779
    %v781 = vpop.f32.mrb[0].mxu0
    %v782 = vpop.f32.mrb[0].mxu0
    %783 = vdwg.mxu0
    %v784 = vadd.f32 %v538, %v737
    %v785 = vadd.f32 %v539, %v739
    %v786 = vadd.f32 %v540, %v778
    %v787 = vadd.f32 %v541, %v780
    %v788 = vxor.u32 %v784, 2147483648
    %v789 = vxor.u32 %v785, 2147483648
    %v790 = vxor.u32 %v786, 2147483648
    %v791 = vmul.f32 %v788, 1.442695
    %v792 = vpow.pop %v791
    %v793 = vmul.f32 %v789, 1.442695
    %v794 = vpow.pop %v793
    %v795 = vmul.f32 %v790, 1.442695
    %v796 = vpow.pop %v795
    %v797 = vadd.f32 %v792, 1.0
    %v798 = vadd.f32 %v794, 1.0
    %v799 = vadd.f32 %v796, 1.0
    %v800 = vrcp.pop %v797
    %v801 = vmul.f32 1.0, %v800
    %v802 = vrcp.pop %v798
    %v803 = vmul.f32 1.0, %v802
    %v804 = vrcp.pop %v799
    %v805 = vmul.f32 1.0, %v804
    %v806 = vtanh.pop %v787
    %v807 = vmul.f32 %v803, 0.0
    %v808 = vmul.f32 %v801, %v806
    %v809 = vadd.f32 %v807, %v808
    %v810 = vtanh.pop %v809
    %v811 = vmul.f32 %v805, %v810
    %v812 = vadd.f32 %v205, %v425
    %v813 = vadd.f32 %v207, %v427
    %v814 = vadd.f32 %v278, %v498
    %v815 = vadd.f32 %v280, %v500
    %v816 = vpack.c.bf16 %v811, %v811
    %817 = vmatprep.subr.bf16.mxu0 %v639
    %818 = vmatpush1.bf16.msra.mxu0 %v638
    %819 = vmatprep.subr.bf16.mxu0 %v643
    %820 = vmatpush1.bf16.msra.mxu0 %v642
    %821 = vmatprep.subr.bf16.mxu0 %v647
    %822 = vmatpush1.bf16.msra.mxu0 %v646
    %823 = vmatprep.subr.bf16.mxu0 %v651
    %824 = vmatpush1.bf16.msra.mxu0 %v650
    %825 = vmatprep.subr.bf16.mxu0 %v655
    %826 = vmatpush1.bf16.msra.mxu0 %v654
    %827 = vmatprep.subr.bf16.mxu0 %v659
    %828 = vmatpush1.bf16.msra.mxu0 %v658
    %829 = vmatprep.subr.bf16.mxu0 %v663
    %830 = vmatpush1.bf16.msra.mxu0 %v662
    %831 = vmatprep.subr.bf16.mxu0 %v667
    %832 = vmatpush1.bf16.msra.mxu0 %v666
    %833 = vmatprep.subr.bf16.mxu0 0
    %834 = vmatpush1.bf16.msra.mxu0 0
    %835 = vmatprep.subr.bf16.mxu0 0
    %836 = vmatpush1.bf16.msra.mxu0 0
    %837 = vmatprep.subr.bf16.mxu0 0
    %838 = vmatpush1.bf16.msra.mxu0 0
    %839 = vmatprep.subr.bf16.mxu0 0
    %840 = vmatpush1.bf16.msra.mxu0 0
    %841 = vmatprep.subr.bf16.mxu0 0
    %842 = vmatpush1.bf16.msra.mxu0 0
    %843 = vmatprep.subr.bf16.mxu0 0
    %844 = vmatpush1.bf16.msra.mxu0 0
    %845 = vmatprep.subr.bf16.mxu0 0
    %846 = vmatpush1.bf16.msra.mxu0 0
    %847 = vmatprep.subr.bf16.mxu0 0
    %848 = vmatpush1.bf16.msra.mxu0 0
    %849 = vmatprep.mubr.bf16.mxu0 0
    %850 = vmatmul.mubr.bf16.gmra.mrb[0].mxu0 %v816
    %v851 = vpop.f32.mrb[0].mxu0
    %v852 = vadd.f32 0.0, %v851
    %v853 = vpop.f32.mrb[0].mxu0
    %v854 = vadd.f32 0.0, %v853
    %v855 = vpop.f32.mrb[0].mxu0
    %v856 = vpop.f32.mrb[0].mxu0
    %857 = vdwg.mxu0
    %858 = vmatprep.subr.bf16.mxu0 %v641
    %859 = vmatpush1.bf16.msra.mxu0 %v640
    %860 = vmatprep.subr.bf16.mxu0 %v645
    %861 = vmatpush1.bf16.msra.mxu0 %v644
    %862 = vmatprep.subr.bf16.mxu0 %v649
    %863 = vmatpush1.bf16.msra.mxu0 %v648
    %864 = vmatprep.subr.bf16.mxu0 %v653
    %865 = vmatpush1.bf16.msra.mxu0 %v652
    %866 = vmatprep.subr.bf16.mxu0 %v657
    %867 = vmatpush1.bf16.msra.mxu0 %v656
    %868 = vmatprep.subr.bf16.mxu0 %v661
    %869 = vmatpush1.bf16.msra.mxu0 %v660
    %870 = vmatprep.subr.bf16.mxu0 %v665
    %871 = vmatpush1.bf16.msra.mxu0 %v664
    %872 = vmatprep.subr.bf16.mxu0 %v669
    %873 = vmatpush1.bf16.msra.mxu0 %v668
    %874 = vmatprep.subr.bf16.mxu0 0
    %875 = vmatpush1.bf16.msra.mxu0 0
    %876 = vmatprep.subr.bf16.mxu0 0
    %877 = vmatpush1.bf16.msra.mxu0 0
    %878 = vmatprep.subr.bf16.mxu0 0
    %879 = vmatpush1.bf16.msra.mxu0 0
    %880 = vmatprep.subr.bf16.mxu0 0
    %881 = vmatpush1.bf16.msra.mxu0 0
    %882 = vmatprep.subr.bf16.mxu0 0
    %883 = vmatpush1.bf16.msra.mxu0 0
    %884 = vmatprep.subr.bf16.mxu0 0
    %885 = vmatpush1.bf16.msra.mxu0 0
    %886 = vmatprep.subr.bf16.mxu0 0
    %887 = vmatpush1.bf16.msra.mxu0 0
    %888 = vmatprep.subr.bf16.mxu0 0
    %889 = vmatpush1.bf16.msra.mxu0 0
    %890 = vmatprep.mubr.bf16.mxu0 0
    %891 = vmatmul.mubr.bf16.gmra.mrb[0].mxu0 %v816
    %v892 = vpop.f32.mrb[0].mxu0
    %v893 = vadd.f32 0.0, %v892
    %v894 = vpop.f32.mrb[0].mxu0
    %v895 = vadd.f32 0.0, %v894
    %v896 = vpop.f32.mrb[0].mxu0
    %v897 = vpop.f32.mrb[0].mxu0
    %898 = vdwg.mxu0
    %v899 = vadd.f32 %v812, %v852
    %v900 = vadd.f32 %v813, %v854
    %v901 = vadd.f32 %v814, %v893
    %v902 = vadd.f32 %v815, %v895
    %v903 = vxor.u32 %v899, 2147483648
    %v904 = vxor.u32 %v900, 2147483648
    %v905 = vxor.u32 %v901, 2147483648
    %v906 = vmul.f32 %v903, 1.442695
    %v907 = vpow.pop %v906
    %v908 = vmul.f32 %v904, 1.442695
    %v909 = vpow.pop %v908
    %v910 = vmul.f32 %v905, 1.442695
    %v911 = vpow.pop %v910
    %v912 = vadd.f32 %v907, 1.0
    %v913 = vadd.f32 %v909, 1.0
    %v914 = vadd.f32 %v911, 1.0
    %v915 = vrcp.pop %v912
    %v916 = vmul.f32 1.0, %v915
    %v917 = vrcp.pop %v913
    %v918 = vmul.f32 1.0, %v917
    %v919 = vrcp.pop %v914
    %v920 = vmul.f32 1.0, %v919
    %v921 = vtanh.pop %v902
    %v922 = vmul.f32 %v918, %v809
    %v923 = vmul.f32 %v916, %v921
    %v924 = vadd.f32 %v922, %v923
    %v925 = vtanh.pop %v924
    %v926 = vmul.f32 %v920, %v925
    %v927 = vadd.f32 %v211, %v419
    %v928 = vadd.f32 %v213, %v421
    %v929 = vadd.f32 %v284, %v492
    %v930 = vadd.f32 %v286, %v494
    %v931 = vpack.c.bf16 %v926, %v926
    %932 = vmatprep.subr.bf16.mxu0 %v639
    %933 = vmatpush1.bf16.msra.mxu0 %v638
    %934 = vmatprep.subr.bf16.mxu0 %v643
    %935 = vmatpush1.bf16.msra.mxu0 %v642
    %936 = vmatprep.subr.bf16.mxu0 %v647
    %937 = vmatpush1.bf16.msra.mxu0 %v646
    %938 = vmatprep.subr.bf16.mxu0 %v651
    %939 = vmatpush1.bf16.msra.mxu0 %v650
    %940 = vmatprep.subr.bf16.mxu0 %v655
    %941 = vmatpush1.bf16.msra.mxu0 %v654
    %942 = vmatprep.subr.bf16.mxu0 %v659
    %943 = vmatpush1.bf16.msra.mxu0 %v658
    %944 = vmatprep.subr.bf16.mxu0 %v663
    %945 = vmatpush1.bf16.msra.mxu0 %v662
    %946 = vmatprep.subr.bf16.mxu0 %v667
    %947 = vmatpush1.bf16.msra.mxu0 %v666
    %948 = vmatprep.subr.bf16.mxu0 0
    %949 = vmatpush1.bf16.msra.mxu0 0
    %950 = vmatprep.subr.bf16.mxu0 0
    %951 = vmatpush1.bf16.msra.mxu0 0
    %952 = vmatprep.subr.bf16.mxu0 0
    %953 = vmatpush1.bf16.msra.mxu0 0
    %954 = vmatprep.subr.bf16.mxu0 0
    %955 = vmatpush1.bf16.msra.mxu0 0
    %956 = vmatprep.subr.bf16.mxu0 0
    %957 = vmatpush1.bf16.msra.mxu0 0
    %958 = vmatprep.subr.bf16.mxu0 0
    %959 = vmatpush1.bf16.msra.mxu0 0
    %960 = vmatprep.subr.bf16.mxu0 0
    %961 = vmatpush1.bf16.msra.mxu0 0
    %962 = vmatprep.subr.bf16.mxu0 0
    %963 = vmatpush1.bf16.msra.mxu0 0
    %964 = vmatprep.mubr.bf16.mxu0 0
    %965 = vmatmul.mubr.bf16.gmra.mrb[0].mxu0 %v931
    %v966 = vpop.f32.mrb[0].mxu0
    %v967 = vadd.f32 0.0, %v966
    %v968 = vpop.f32.mrb[0].mxu0
    %v969 = vadd.f32 0.0, %v968
    %v970 = vpop.f32.mrb[0].mxu0
    %v971 = vpop.f32.mrb[0].mxu0
    %972 = vdwg.mxu0
    %973 = vmatprep.subr.bf16.mxu0 %v641
    %974 = vmatpush1.bf16.msra.mxu0 %v640
    %975 = vmatprep.subr.bf16.mxu0 %v645
    %976 = vmatpush1.bf16.msra.mxu0 %v644
    %977 = vmatprep.subr.bf16.mxu0 %v649
    %978 = vmatpush1.bf16.msra.mxu0 %v648
    %979 = vmatprep.subr.bf16.mxu0 %v653
    %980 = vmatpush1.bf16.msra.mxu0 %v652
    %981 = vmatprep.subr.bf16.mxu0 %v657
    %982 = vmatpush1.bf16.msra.mxu0 %v656
    %983 = vmatprep.subr.bf16.mxu0 %v661
    %984 = vmatpush1.bf16.msra.mxu0 %v660
    %985 = vmatprep.subr.bf16.mxu0 %v665
    %986 = vmatpush1.bf16.msra.mxu0 %v664
    %987 = vmatprep.subr.bf16.mxu0 %v669
    %988 = vmatpush1.bf16.msra.mxu0 %v668
    %989 = vmatprep.subr.bf16.mxu0 0
    %990 = vmatpush1.bf16.msra.mxu0 0
    %991 = vmatprep.subr.bf16.mxu0 0
    %992 = vmatpush1.bf16.msra.mxu0 0
    %993 = vmatprep.subr.bf16.mxu0 0
    %994 = vmatpush1.bf16.msra.mxu0 0
    %995 = vmatprep.subr.bf16.mxu0 0
    %996 = vmatpush1.bf16.msra.mxu0 0
    %997 = vmatprep.subr.bf16.mxu0 0
    %998 = vmatpush1.bf16.msra.mxu0 0
    %999 = vmatprep.subr.bf16.mxu0 0
    %1000 = vmatpush1.bf16.msra.mxu0 0
    %1001 = vmatprep.subr.bf16.mxu0 0
    %1002 = vmatpush1.bf16.msra.mxu0 0
    %1003 = vmatprep.subr.bf16.mxu0 0
    %1004 = vmatpush1.bf16.msra.mxu0 0
    %1005 = vmatprep.mubr.bf16.mxu0 0
    %1006 = vmatmul.mubr.bf16.gmra.mrb[0].mxu0 %v931
    %v1007 = vpop.f32.mrb[0].mxu0
    %v1008 = vadd.f32 0.0, %v1007
    %v1009 = vpop.f32.mrb[0].mxu0
    %v1010 = vadd.f32 0.0, %v1009
    %v1011 = vpop.f32.mrb[0].mxu0
    %v1012 = vpop.f32.mrb[0].mxu0
    %1013 = vdwg.mxu0
    %v1014 = vadd.f32 %v927, %v967
    %v1015 = vadd.f32 %v928, %v969
    %v1016 = vadd.f32 %v929, %v1008
    %v1017 = vadd.f32 %v930, %v1010
    %v1018 = vxor.u32 %v1014, 2147483648
    %v1019 = vxor.u32 %v1015, 2147483648
    %v1020 = vxor.u32 %v1016, 2147483648
    %v1021 = vmul.f32 %v1018, 1.442695
    %v1022 = vpow.pop %v1021
    %v1023 = vmul.f32 %v1019, 1.442695
    %v1024 = vpow.pop %v1023
    %v1025 = vmul.f32 %v1020, 1.442695
    %v1026 = vpow.pop %v1025
    %v1027 = vadd.f32 %v1022, 1.0
    %v1028 = vadd.f32 %v1024, 1.0
    %v1029 = vadd.f32 %v1026, 1.0
    %v1030 = vrcp.pop %v1027
    %v1031 = vmul.f32 1.0, %v1030
    %v1032 = vrcp.pop %v1028
    %v1033 = vmul.f32 1.0, %v1032
    %v1034 = vrcp.pop %v1029
    %v1035 = vmul.f32 1.0, %v1034
    %v1036 = vtanh.pop %v1017
    %v1037 = vmul.f32 %v1033, %v924
    %v1038 = vmul.f32 %v1031, %v1036
    %v1039 = vadd.f32 %v1037, %v1038
    %v1040 = vtanh.pop %v1039
    %v1041 = vmul.f32 %v1035, %v1040
    %v1042 = vadd.f32 %v215, %v415
    %v1043 = vadd.f32 %v217, %v417
    %v1044 = vadd.f32 %v288, %v488
    %v1045 = vadd.f32 %v290, %v490
    %v1046 = vpack.c.bf16 %v1041, %v1041
    %1047 = vmatprep.subr.bf16.mxu0 %v639
    %1048 = vmatpush1.bf16.msra.mxu0 %v638
    %1049 = vmatprep.subr.bf16.mxu0 %v643
    %1050 = vmatpush1.bf16.msra.mxu0 %v642
    %1051 = vmatprep.subr.bf16.mxu0 %v647
    %1052 = vmatpush1.bf16.msra.mxu0 %v646
    %1053 = vmatprep.subr.bf16.mxu0 %v651
    %1054 = vmatpush1.bf16.msra.mxu0 %v650
    %1055 = vmatprep.subr.bf16.mxu0 %v655
    %1056 = vmatpush1.bf16.msra.mxu0 %v654
    %1057 = vmatprep.subr.bf16.mxu0 %v659
    %1058 = vmatpush1.bf16.msra.mxu0 %v658
    %1059 = vmatprep.subr.bf16.mxu0 %v663
    %1060 = vmatpush1.bf16.msra.mxu0 %v662
    %1061 = vmatprep.subr.bf16.mxu0 %v667
    %1062 = vmatpush1.bf16.msra.mxu0 %v666
    %1063 = vmatprep.subr.bf16.mxu0 0
    %1064 = vmatpush1.bf16.msra.mxu0 0
    %1065 = vmatprep.subr.bf16.mxu0 0
    %1066 = vmatpush1.bf16.msra.mxu0 0
    %1067 = vmatprep.subr.bf16.mxu0 0
    %1068 = vmatpush1.bf16.msra.mxu0 0
    %1069 = vmatprep.subr.bf16.mxu0 0
    %1070 = vmatpush1.bf16.msra.mxu0 0
    %1071 = vmatprep.subr.bf16.mxu0 0
    %1072 = vmatpush1.bf16.msra.mxu0 0
    %1073 = vmatprep.subr.bf16.mxu0 0
    %1074 = vmatpush1.bf16.msra.mxu0 0
    %1075 = vmatprep.subr.bf16.mxu0 0
    %1076 = vmatpush1.bf16.msra.mxu0 0
    %1077 = vmatprep.subr.bf16.mxu0 0
    %1078 = vmatpush1.bf16.msra.mxu0 0
    %1079 = vmatprep.mubr.bf16.mxu0 0
    %1080 = vmatmul.mubr.bf16.gmra.mrb[0].mxu0 %v1046
    %v1081 = vpop.f32.mrb[0].mxu0
    %v1082 = vadd.f32 0.0, %v1081
    %v1083 = vpop.f32.mrb[0].mxu0
    %v1084 = vadd.f32 0.0, %v1083
    %v1085 = vpop.f32.mrb[0].mxu0
    %v1086 = vpop.f32.mrb[0].mxu0
    %1087 = vdwg.mxu0
    %1088 = vmatprep.subr.bf16.mxu0 %v641
    %1089 = vmatpush1.bf16.msra.mxu0 %v640
    %1090 = vmatprep.subr.bf16.mxu0 %v645
    %1091 = vmatpush1.bf16.msra.mxu0 %v644
    %1092 = vmatprep.subr.bf16.mxu0 %v649
    %1093 = vmatpush1.bf16.msra.mxu0 %v648
    %1094 = vmatprep.subr.bf16.mxu0 %v653
    %1095 = vmatpush1.bf16.msra.mxu0 %v652
    %1096 = vmatprep.subr.bf16.mxu0 %v657
    %1097 = vmatpush1.bf16.msra.mxu0 %v656
    %1098 = vmatprep.subr.bf16.mxu0 %v661
    %1099 = vmatpush1.bf16.msra.mxu0 %v660
    %1100 = vmatprep.subr.bf16.mxu0 %v665
    %1101 = vmatpush1.bf16.msra.mxu0 %v664
    %1102 = vmatprep.subr.bf16.mxu0 %v669
    %1103 = vmatpush1.bf16.msra.mxu0 %v668
    %1104 = vmatprep.subr.bf16.mxu0 0
    %1105 = vmatpush1.bf16.msra.mxu0 0
    %1106 = vmatprep.subr.bf16.mxu0 0
    %1107 = vmatpush1.bf16.msra.mxu0 0
    %1108 = vmatprep.subr.bf16.mxu0 0
    %1109 = vmatpush1.bf16.msra.mxu0 0
    %1110 = vmatprep.subr.bf16.mxu0 0
    %1111 = vmatpush1.bf16.msra.mxu0 0
    %1112 = vmatprep.subr.bf16.mxu0 0
    %1113 = vmatpush1.bf16.msra.mxu0 0
    %1114 = vmatprep.subr.bf16.mxu0 0
    %1115 = vmatpush1.bf16.msra.mxu0 0
    %1116 = vmatprep.subr.bf16.mxu0 0
    %1117 = vmatpush1.bf16.msra.mxu0 0
    %1118 = vmatprep.subr.bf16.mxu0 0
    %1119 = vmatpush1.bf16.msra.mxu0 0
    %1120 = vmatprep.mubr.bf16.mxu0 0
    %1121 = vmatmul.mubr.bf16.gmra.mrb[0].mxu0 %v1046
    %v1122 = vpop.f32.mrb[0].mxu0
    %v1123 = vadd.f32 0.0, %v1122
    %v1124 = vpop.f32.mrb[0].mxu0
    %v1125 = vadd.f32 0.0, %v1124
    %v1126 = vpop.f32.mrb[0].mxu0
    %v1127 = vpop.f32.mrb[0].mxu0
    %1128 = vdwg.mxu0
    %v1129 = vadd.f32 %v1042, %v1082
    %v1130 = vadd.f32 %v1043, %v1084
    %v1131 = vadd.f32 %v1044, %v1123
    %v1132 = vadd.f32 %v1045, %v1125
    %v1133 = vxor.u32 %v1129, 2147483648
    %v1134 = vxor.u32 %v1130, 2147483648
    %v1135 = vxor.u32 %v1131, 2147483648
    %v1136 = vmul.f32 %v1133, 1.442695
    %v1137 = vpow.pop %v1136
    %v1138 = vmul.f32 %v1134, 1.442695
    %v1139 = vpow.pop %v1138
    %v1140 = vmul.f32 %v1135, 1.442695
    %v1141 = vpow.pop %v1140
    %v1142 = vadd.f32 %v1137, 1.0
    %v1143 = vadd.f32 %v1139, 1.0
    %v1144 = vadd.f32 %v1141, 1.0
    %v1145 = vrcp.pop %v1142
    %v1146 = vmul.f32 1.0, %v1145
    %v1147 = vrcp.pop %v1143
    %v1148 = vmul.f32 1.0, %v1147
    %v1149 = vrcp.pop %v1144
    %v1150 = vmul.f32 1.0, %v1149
    %v1151 = vtanh.pop %v1132
    %v1152 = vmul.f32 %v1148, %v1039
    %v1153 = vmul.f32 %v1146, %v1151
    %v1154 = vadd.f32 %v1152, %v1153
    %v1155 = vtanh.pop %v1154
    %v1156 = vmul.f32 %v1150, %v1155
    %v1157 = vadd.f32 %v221, %v409
    %v1158 = vadd.f32 %v223, %v411
    %v1159 = vadd.f32 %v294, %v482
    %v1160 = vadd.f32 %v296, %v484
    %v1161 = vpack.c.bf16 %v1156, %v1156
    %1162 = vmatprep.subr.bf16.mxu0 %v639
    %1163 = vmatpush1.bf16.msra.mxu0 %v638
    %1164 = vmatprep.subr.bf16.mxu0 %v643
    %1165 = vmatpush1.bf16.msra.mxu0 %v642
    %1166 = vmatprep.subr.bf16.mxu0 %v647
    %1167 = vmatpush1.bf16.msra.mxu0 %v646
    %1168 = vmatprep.subr.bf16.mxu0 %v651
    %1169 = vmatpush1.bf16.msra.mxu0 %v650
    %1170 = vmatprep.subr.bf16.mxu0 %v655
    %1171 = vmatpush1.bf16.msra.mxu0 %v654
    %1172 = vmatprep.subr.bf16.mxu0 %v659
    %1173 = vmatpush1.bf16.msra.mxu0 %v658
    %1174 = vmatprep.subr.bf16.mxu0 %v663
    %1175 = vmatpush1.bf16.msra.mxu0 %v662
    %1176 = vmatprep.subr.bf16.mxu0 %v667
    %1177 = vmatpush1.bf16.msra.mxu0 %v666
    %1178 = vmatprep.subr.bf16.mxu0 0
    %1179 = vmatpush1.bf16.msra.mxu0 0
    %1180 = vmatprep.subr.bf16.mxu0 0
    %1181 = vmatpush1.bf16.msra.mxu0 0
    %1182 = vmatprep.subr.bf16.mxu0 0
    %1183 = vmatpush1.bf16.msra.mxu0 0
    %1184 = vmatprep.subr.bf16.mxu0 0
    %1185 = vmatpush1.bf16.msra.mxu0 0
    %1186 = vmatprep.subr.bf16.mxu0 0
    %1187 = vmatpush1.bf16.msra.mxu0 0
    %1188 = vmatprep.subr.bf16.mxu0 0
    %1189 = vmatpush1.bf16.msra.mxu0 0
    %1190 = vmatprep.subr.bf16.mxu0 0
    %1191 = vmatpush1.bf16.msra.mxu0 0
    %1192 = vmatprep.subr.bf16.mxu0 0
    %1193 = vmatpush1.bf16.msra.mxu0 0
    %1194 = vmatprep.mubr.bf16.mxu0 0
    %1195 = vmatmul.mubr.bf16.gmra.mrb[0].mxu0 %v1161
    %v1196 = vpop.f32.mrb[0].mxu0
    %v1197 = vadd.f32 0.0, %v1196
    %v1198 = vpop.f32.mrb[0].mxu0
    %v1199 = vadd.f32 0.0, %v1198
    %v1200 = vpop.f32.mrb[0].mxu0
    %v1201 = vpop.f32.mrb[0].mxu0
    %1202 = vdwg.mxu0
    %1203 = vmatprep.subr.bf16.mxu0 %v641
    %1204 = vmatpush1.bf16.msra.mxu0 %v640
    %1205 = vmatprep.subr.bf16.mxu0 %v645
    %1206 = vmatpush1.bf16.msra.mxu0 %v644
    %1207 = vmatprep.subr.bf16.mxu0 %v649
    %1208 = vmatpush1.bf16.msra.mxu0 %v648
    %1209 = vmatprep.subr.bf16.mxu0 %v653
    %1210 = vmatpush1.bf16.msra.mxu0 %v652
    %1211 = vmatprep.subr.bf16.mxu0 %v657
    %1212 = vmatpush1.bf16.msra.mxu0 %v656
    %1213 = vmatprep.subr.bf16.mxu0 %v661
    %1214 = vmatpush1.bf16.msra.mxu0 %v660
    %1215 = vmatprep.subr.bf16.mxu0 %v665
    %1216 = vmatpush1.bf16.msra.mxu0 %v664
    %1217 = vmatprep.subr.bf16.mxu0 %v669
    %1218 = vmatpush1.bf16.msra.mxu0 %v668
    %1219 = vmatprep.subr.bf16.mxu0 0
    %1220 = vmatpush1.bf16.msra.mxu0 0
    %1221 = vmatprep.subr.bf16.mxu0 0
    %1222 = vmatpush1.bf16.msra.mxu0 0
    %1223 = vmatprep.subr.bf16.mxu0 0
    %1224 = vmatpush1.bf16.msra.mxu0 0
    %1225 = vmatprep.subr.bf16.mxu0 0
    %1226 = vmatpush1.bf16.msra.mxu0 0
    %1227 = vmatprep.subr.bf16.mxu0 0
    %1228 = vmatpush1.bf16.msra.mxu0 0
    %1229 = vmatprep.subr.bf16.mxu0 0
    %1230 = vmatpush1.bf16.msra.mxu0 0
    %1231 = vmatprep.subr.bf16.mxu0 0
    %1232 = vmatpush1.bf16.msra.mxu0 0
    %1233 = vmatprep.subr.bf16.mxu0 0
    %1234 = vmatpush1.bf16.msra.mxu0 0
    %1235 = vmatprep.mubr.bf16.mxu0 0
    %1236 = vmatmul.mubr.bf16.gmra.mrb[0].mxu0 %v1161
    %v1237 = vpop.f32.mrb[0].mxu0
    %v1238 = vadd.f32 0.0, %v1237
    %v1239 = vpop.f32.mrb[0].mxu0
    %v1240 = vadd.f32 0.0, %v1239
    %v1241 = vpop.f32.mrb[0].mxu0
    %v1242 = vpop.f32.mrb[0].mxu0
    %1243 = vdwg.mxu0
    %v1244 = vadd.f32 %v1157, %v1197
    %v1245 = vadd.f32 %v1158, %v1199
    %v1246 = vadd.f32 %v1159, %v1238
    %v1247 = vadd.f32 %v1160, %v1240
    %v1248 = vxor.u32 %v1244, 2147483648
    %v1249 = vxor.u32 %v1245, 2147483648
    %v1250 = vxor.u32 %v1246, 2147483648
    %v1251 = vmul.f32 %v1248, 1.442695
    %v1252 = vpow.pop %v1251
    %v1253 = vmul.f32 %v1249, 1.442695
    %v1254 = vpow.pop %v1253
    %v1255 = vmul.f32 %v1250, 1.442695
    %v1256 = vpow.pop %v1255
    %v1257 = vadd.f32 %v1252, 1.0
    %v1258 = vadd.f32 %v1254, 1.0
    %v1259 = vadd.f32 %v1256, 1.0
    %v1260 = vrcp.pop %v1257
    %v1261 = vmul.f32 1.0, %v1260
    %v1262 = vrcp.pop %v1258
    %v1263 = vmul.f32 1.0, %v1262
    %v1264 = vrcp.pop %v1259
    %v1265 = vmul.f32 1.0, %v1264
    %v1266 = vtanh.pop %v1247
    %v1267 = vmul.f32 %v1263, %v1154
    %v1268 = vmul.f32 %v1261, %v1266
    %v1269 = vadd.f32 %v1267, %v1268
    %v1270 = vtanh.pop %v1269
    %v1271 = vmul.f32 %v1265, %v1270
    %v1272 = vadd.f32 %v225, %v405
    %v1273 = vadd.f32 %v227, %v407
    %v1274 = vadd.f32 %v298, %v478
    %v1275 = vadd.f32 %v300, %v480
    %v1276 = vpack.c.bf16 %v1271, %v1271
    %1277 = vmatprep.subr.bf16.mxu0 %v639
    %1278 = vmatpush1.bf16.msra.mxu0 %v638
    %1279 = vmatprep.subr.bf16.mxu0 %v643
    %1280 = vmatpush1.bf16.msra.mxu0 %v642
    %1281 = vmatprep.subr.bf16.mxu0 %v647
    %1282 = vmatpush1.bf16.msra.mxu0 %v646
    %1283 = vmatprep.subr.bf16.mxu0 %v651
    %1284 = vmatpush1.bf16.msra.mxu0 %v650
    %1285 = vmatprep.subr.bf16.mxu0 %v655
    %1286 = vmatpush1.bf16.msra.mxu0 %v654
    %1287 = vmatprep.subr.bf16.mxu0 %v659
    %1288 = vmatpush1.bf16.msra.mxu0 %v658
    %1289 = vmatprep.subr.bf16.mxu0 %v663
    %1290 = vmatpush1.bf16.msra.mxu0 %v662
    %1291 = vmatprep.subr.bf16.mxu0 %v667
    %1292 = vmatpush1.bf16.msra.mxu0 %v666
    %1293 = vmatprep.subr.bf16.mxu0 0
    %1294 = vmatpush1.bf16.msra.mxu0 0
    %1295 = vmatprep.subr.bf16.mxu0 0
    %1296 = vmatpush1.bf16.msra.mxu0 0
    %1297 = vmatprep.subr.bf16.mxu0 0
    %1298 = vmatpush1.bf16.msra.mxu0 0
    %1299 = vmatprep.subr.bf16.mxu0 0
    %1300 = vmatpush1.bf16.msra.mxu0 0
    %1301 = vmatprep.subr.bf16.mxu0 0
    %1302 = vmatpush1.bf16.msra.mxu0 0
    %1303 = vmatprep.subr.bf16.mxu0 0
    %1304 = vmatpush1.bf16.msra.mxu0 0
    %1305 = vmatprep.subr.bf16.mxu0 0
    %1306 = vmatpush1.bf16.msra.mxu0 0
    %1307 = vmatprep.subr.bf16.mxu0 0
    %1308 = vmatpush1.bf16.msra.mxu0 0
    %1309 = vmatprep.mubr.bf16.mxu0 0
    %1310 = vmatmul.mubr.bf16.gmra.mrb[0].mxu0 %v1276
    %v1311 = vpop.f32.mrb[0].mxu0
    %v1312 = vadd.f32 0.0, %v1311
    %v1313 = vpop.f32.mrb[0].mxu0
    %v1314 = vadd.f32 0.0, %v1313
    %v1315 = vpop.f32.mrb[0].mxu0
    %v1316 = vpop.f32.mrb[0].mxu0
    %1317 = vdwg.mxu0
    %1318 = vmatprep.subr.bf16.mxu0 %v641
    %1319 = vmatpush1.bf16.msra.mxu0 %v640
    %1320 = vmatprep.subr.bf16.mxu0 %v645
    %1321 = vmatpush1.bf16.msra.mxu0 %v644
    %1322 = vmatprep.subr.bf16.mxu0 %v649
    %1323 = vmatpush1.bf16.msra.mxu0 %v648
    %1324 = vmatprep.subr.bf16.mxu0 %v653
    %1325 = vmatpush1.bf16.msra.mxu0 %v652
    %1326 = vmatprep.subr.bf16.mxu0 %v657
    %1327 = vmatpush1.bf16.msra.mxu0 %v656
    %1328 = vmatprep.subr.bf16.mxu0 %v661
    %1329 = vmatpush1.bf16.msra.mxu0 %v660
    %1330 = vmatprep.subr.bf16.mxu0 %v665
    %1331 = vmatpush1.bf16.msra.mxu0 %v664
    %1332 = vmatprep.subr.bf16.mxu0 %v669
    %1333 = vmatpush1.bf16.msra.mxu0 %v668
    %1334 = vmatprep.subr.bf16.mxu0 0
    %1335 = vmatpush1.bf16.msra.mxu0 0
    %1336 = vmatprep.subr.bf16.mxu0 0
    %1337 = vmatpush1.bf16.msra.mxu0 0
    %1338 = vmatprep.subr.bf16.mxu0 0
    %1339 = vmatpush1.bf16.msra.mxu0 0
    %1340 = vmatprep.subr.bf16.mxu0 0
    %1341 = vmatpush1.bf16.msra.mxu0 0
    %1342 = vmatprep.subr.bf16.mxu0 0
    %1343 = vmatpush1.bf16.msra.mxu0 0
    %1344 = vmatprep.subr.bf16.mxu0 0
    %1345 = vmatpush1.bf16.msra.mxu0 0
    %1346 = vmatprep.subr.bf16.mxu0 0
    %1347 = vmatpush1.bf16.msra.mxu0 0
    %1348 = vmatprep.subr.bf16.mxu0 0
    %1349 = vmatpush1.bf16.msra.mxu0 0
    %1350 = vmatprep.mubr.bf16.mxu0 0
    %1351 = vmatmul.mubr.bf16.gmra.mrb[0].mxu0 %v1276
    %v1352 = vpop.f32.mrb[0].mxu0
    %v1353 = vadd.f32 0.0, %v1352
    %v1354 = vpop.f32.mrb[0].mxu0
    %v1355 = vadd.f32 0.0, %v1354
    %v1356 = vpop.f32.mrb[0].mxu0
    %v1357 = vpop.f32.mrb[0].mxu0
    %1358 = vdwg.mxu0
    %v1359 = vadd.f32 %v1272, %v1312
    %v1360 = vadd.f32 %v1273, %v1314
    %v1361 = vadd.f32 %v1274, %v1353
    %v1362 = vadd.f32 %v1275, %v1355
    %v1363 = vxor.u32 %v1359, 2147483648
    %v1364 = vxor.u32 %v1360, 2147483648
    %v1365 = vxor.u32 %v1361, 2147483648
    %v1366 = vmul.f32 %v1363, 1.442695
    %v1367 = vpow.pop %v1366
    %v1368 = vmul.f32 %v1364, 1.442695
    %v1369 = vpow.pop %v1368
    %v1370 = vmul.f32 %v1365, 1.442695
    %v1371 = vpow.pop %v1370
    %v1372 = vadd.f32 %v1367, 1.0
    %v1373 = vadd.f32 %v1369, 1.0
    %v1374 = vadd.f32 %v1371, 1.0
    %v1375 = vrcp.pop %v1372
    %v1376 = vmul.f32 1.0, %v1375
    %v1377 = vrcp.pop %v1373
    %v1378 = vmul.f32 1.0, %v1377
    %v1379 = vrcp.pop %v1374
    %v1380 = vmul.f32 1.0, %v1379
    %v1381 = vtanh.pop %v1362
    %v1382 = vmul.f32 %v1378, %v1269
    %v1383 = vmul.f32 %v1376, %v1381
    %v1384 = vadd.f32 %v1382, %v1383
    %v1385 = vtanh.pop %v1384
    %v1386 = vmul.f32 %v1380, %v1385
    %v1387 = vadd.f32 %v231, %v399
    %v1388 = vadd.f32 %v233, %v401
    %v1389 = vadd.f32 %v304, %v472
    %v1390 = vadd.f32 %v306, %v474
    %v1391 = vpack.c.bf16 %v1386, %v1386
    %1392 = vmatprep.subr.bf16.mxu0 %v639
    %1393 = vmatpush1.bf16.msra.mxu0 %v638
    %1394 = vmatprep.subr.bf16.mxu0 %v643
    %1395 = vmatpush1.bf16.msra.mxu0 %v642
    %1396 = vmatprep.subr.bf16.mxu0 %v647
    %1397 = vmatpush1.bf16.msra.mxu0 %v646
    %1398 = vmatprep.subr.bf16.mxu0 %v651
    %1399 = vmatpush1.bf16.msra.mxu0 %v650
    %1400 = vmatprep.subr.bf16.mxu0 %v655
    %1401 = vmatpush1.bf16.msra.mxu0 %v654
    %1402 = vmatprep.subr.bf16.mxu0 %v659
    %1403 = vmatpush1.bf16.msra.mxu0 %v658
    %1404 = vmatprep.subr.bf16.mxu0 %v663
    %1405 = vmatpush1.bf16.msra.mxu0 %v662
    %1406 = vmatprep.subr.bf16.mxu0 %v667
    %1407 = vmatpush1.bf16.msra.mxu0 %v666
    %1408 = vmatprep.subr.bf16.mxu0 0
    %1409 = vmatpush1.bf16.msra.mxu0 0
    %1410 = vmatprep.subr.bf16.mxu0 0
    %1411 = vmatpush1.bf16.msra.mxu0 0
    %1412 = vmatprep.subr.bf16.mxu0 0
    %1413 = vmatpush1.bf16.msra.mxu0 0
    %1414 = vmatprep.subr.bf16.mxu0 0
    %1415 = vmatpush1.bf16.msra.mxu0 0
    %1416 = vmatprep.subr.bf16.mxu0 0
    %1417 = vmatpush1.bf16.msra.mxu0 0
    %1418 = vmatprep.subr.bf16.mxu0 0
    %1419 = vmatpush1.bf16.msra.mxu0 0
    %1420 = vmatprep.subr.bf16.mxu0 0
    %1421 = vmatpush1.bf16.msra.mxu0 0
    %1422 = vmatprep.subr.bf16.mxu0 0
    %1423 = vmatpush1.bf16.msra.mxu0 0
    %1424 = vmatprep.mubr.bf16.mxu0 0
    %1425 = vmatmul.mubr.bf16.gmra.mrb[0].mxu0 %v1391
    %v1426 = vpop.f32.mrb[0].mxu0
    %v1427 = vadd.f32 0.0, %v1426
    %v1428 = vpop.f32.mrb[0].mxu0
    %v1429 = vadd.f32 0.0, %v1428
    %v1430 = vpop.f32.mrb[0].mxu0
    %v1431 = vpop.f32.mrb[0].mxu0
    %1432 = vdwg.mxu0
    %1433 = vmatprep.subr.bf16.mxu0 %v641
    %1434 = vmatpush1.bf16.msra.mxu0 %v640
    %1435 = vmatprep.subr.bf16.mxu0 %v645
    %1436 = vmatpush1.bf16.msra.mxu0 %v644
    %1437 = vmatprep.subr.bf16.mxu0 %v649
    %1438 = vmatpush1.bf16.msra.mxu0 %v648
    %1439 = vmatprep.subr.bf16.mxu0 %v653
    %1440 = vmatpush1.bf16.msra.mxu0 %v652
    %1441 = vmatprep.subr.bf16.mxu0 %v657
    %1442 = vmatpush1.bf16.msra.mxu0 %v656
    %1443 = vmatprep.subr.bf16.mxu0 %v661
    %1444 = vmatpush1.bf16.msra.mxu0 %v660
    %1445 = vmatprep.subr.bf16.mxu0 %v665
    %1446 = vmatpush1.bf16.msra.mxu0 %v664
    %1447 = vmatprep.subr.bf16.mxu0 %v669
    %1448 = vmatpush1.bf16.msra.mxu0 %v668
    %1449 = vmatprep.subr.bf16.mxu0 0
    %1450 = vmatpush1.bf16.msra.mxu0 0
    %1451 = vmatprep.subr.bf16.mxu0 0
    %1452 = vmatpush1.bf16.msra.mxu0 0
    %1453 = vmatprep.subr.bf16.mxu0 0
    %1454 = vmatpush1.bf16.msra.mxu0 0
    %1455 = vmatprep.subr.bf16.mxu0 0
    %1456 = vmatpush1.bf16.msra.mxu0 0
    %1457 = vmatprep.subr.bf16.mxu0 0
    %1458 = vmatpush1.bf16.msra.mxu0 0
    %1459 = vmatprep.subr.bf16.mxu0 0
    %1460 = vmatpush1.bf16.msra.mxu0 0
    %1461 = vmatprep.subr.bf16.mxu0 0
    %1462 = vmatpush1.bf16.msra.mxu0 0
    %1463 = vmatprep.subr.bf16.mxu0 0
    %1464 = vmatpush1.bf16.msra.mxu0 0
    %1465 = vmatprep.mubr.bf16.mxu0 0
    %1466 = vmatmul.mubr.bf16.gmra.mrb[0].mxu0 %v1391
    %v1467 = vpop.f32.mrb[0].mxu0
    %v1468 = vadd.f32 0.0, %v1467
    %v1469 = vpop.f32.mrb[0].mxu0
    %v1470 = vadd.f32 0.0, %v1469
    %v1471 = vpop.f32.mrb[0].mxu0
    %v1472 = vpop.f32.mrb[0].mxu0
    %1473 = vdwg.mxu0
    %v1474 = vadd.f32 %v1387, %v1427
    %v1475 = vadd.f32 %v1388, %v1429
    %v1476 = vadd.f32 %v1389, %v1468
    %v1477 = vadd.f32 %v1390, %v1470
    %v1478 = vxor.u32 %v1474, 2147483648
    %v1479 = vxor.u32 %v1475, 2147483648
    %v1480 = vxor.u32 %v1476, 2147483648
    %v1481 = vmul.f32 %v1478, 1.442695
    %v1482 = vpow.pop %v1481
    %v1483 = vmul.f32 %v1479, 1.442695
    %v1484 = vpow.pop %v1483
    %v1485 = vmul.f32 %v1480, 1.442695
    %v1486 = vpow.pop %v1485
    %v1487 = vadd.f32 %v1482, 1.0
    %v1488 = vadd.f32 %v1484, 1.0
    %v1489 = vadd.f32 %v1486, 1.0
    %v1490 = vrcp.pop %v1487
    %v1491 = vmul.f32 1.0, %v1490
    %v1492 = vrcp.pop %v1488
    %v1493 = vmul.f32 1.0, %v1492
    %v1494 = vrcp.pop %v1489
    %v1495 = vmul.f32 1.0, %v1494
    %v1496 = vtanh.pop %v1477
    %v1497 = vmul.f32 %v1493, %v1384
    %v1498 = vmul.f32 %v1491, %v1496
    %v1499 = vadd.f32 %v1497, %v1498
    %v1500 = vtanh.pop %v1499
    %v1501 = vmul.f32 %v1495, %v1500
    %v1502 = vadd.f32 %v235, %v395
    %v1503 = vadd.f32 %v237, %v397
    %v1504 = vadd.f32 %v308, %v468
    %v1505 = vadd.f32 %v310, %v470
    %v1506 = vpack.c.bf16 %v1501, %v1501
    %1507 = vmatprep.subr.bf16.mxu0 %v639
    %1508 = vmatpush1.bf16.msra.mxu0 %v638
    %1509 = vmatprep.subr.bf16.mxu0 %v643
    %1510 = vmatpush1.bf16.msra.mxu0 %v642
    %1511 = vmatprep.subr.bf16.mxu0 %v647
    %1512 = vmatpush1.bf16.msra.mxu0 %v646
    %1513 = vmatprep.subr.bf16.mxu0 %v651
    %1514 = vmatpush1.bf16.msra.mxu0 %v650
    %1515 = vmatprep.subr.bf16.mxu0 %v655
    %1516 = vmatpush1.bf16.msra.mxu0 %v654
    %1517 = vmatprep.subr.bf16.mxu0 %v659
    %1518 = vmatpush1.bf16.msra.mxu0 %v658
    %1519 = vmatprep.subr.bf16.mxu0 %v663
    %1520 = vmatpush1.bf16.msra.mxu0 %v662
    %1521 = vmatprep.subr.bf16.mxu0 %v667
    %1522 = vmatpush1.bf16.msra.mxu0 %v666
    %1523 = vmatprep.subr.bf16.mxu0 0
    %1524 = vmatpush1.bf16.msra.mxu0 0
    %1525 = vmatprep.subr.bf16.mxu0 0
    %1526 = vmatpush1.bf16.msra.mxu0 0
    %1527 = vmatprep.subr.bf16.mxu0 0
    %1528 = vmatpush1.bf16.msra.mxu0 0
    %1529 = vmatprep.subr.bf16.mxu0 0
    %1530 = vmatpush1.bf16.msra.mxu0 0
    %1531 = vmatprep.subr.bf16.mxu0 0
    %1532 = vmatpush1.bf16.msra.mxu0 0
    %1533 = vmatprep.subr.bf16.mxu0 0
    %1534 = vmatpush1.bf16.msra.mxu0 0
    %1535 = vmatprep.subr.bf16.mxu0 0
    %1536 = vmatpush1.bf16.msra.mxu0 0
    %1537 = vmatprep.subr.bf16.mxu0 0
    %1538 = vmatpush1.bf16.msra.mxu0 0
    %1539 = vmatprep.mubr.bf16.mxu0 0
    %1540 = vmatmul.mubr.bf16.gmra.mrb[0].mxu0 %v1506
    %v1541 = vpop.f32.mrb[0].mxu0
    %v1542 = vadd.f32 0.0, %v1541
    %v1543 = vpop.f32.mrb[0].mxu0
    %v1544 = vadd.f32 0.0, %v1543
    %v1545 = vpop.f32.mrb[0].mxu0
    %v1546 = vpop.f32.mrb[0].mxu0
    %1547 = vdwg.mxu0
    %1548 = vmatprep.subr.bf16.mxu0 %v641
    %1549 = vmatpush1.bf16.msra.mxu0 %v640
    %1550 = vmatprep.subr.bf16.mxu0 %v645
    %1551 = vmatpush1.bf16.msra.mxu0 %v644
    %1552 = vmatprep.subr.bf16.mxu0 %v649
    %1553 = vmatpush1.bf16.msra.mxu0 %v648
    %1554 = vmatprep.subr.bf16.mxu0 %v653
    %1555 = vmatpush1.bf16.msra.mxu0 %v652
    %1556 = vmatprep.subr.bf16.mxu0 %v657
    %1557 = vmatpush1.bf16.msra.mxu0 %v656
    %1558 = vmatprep.subr.bf16.mxu0 %v661
    %1559 = vmatpush1.bf16.msra.mxu0 %v660
    %1560 = vmatprep.subr.bf16.mxu0 %v665
    %1561 = vmatpush1.bf16.msra.mxu0 %v664
    %1562 = vmatprep.subr.bf16.mxu0 %v669
    %1563 = vmatpush1.bf16.msra.mxu0 %v668
    %1564 = vmatprep.subr.bf16.mxu0 0
    %1565 = vmatpush1.bf16.msra.mxu0 0
    %1566 = vmatprep.subr.bf16.mxu0 0
    %1567 = vmatpush1.bf16.msra.mxu0 0
    %1568 = vmatprep.subr.bf16.mxu0 0
    %1569 = vmatpush1.bf16.msra.mxu0 0
    %1570 = vmatprep.subr.bf16.mxu0 0
    %1571 = vmatpush1.bf16.msra.mxu0 0
    %1572 = vmatprep.subr.bf16.mxu0 0
    %1573 = vmatpush1.bf16.msra.mxu0 0
    %1574 = vmatprep.subr.bf16.mxu0 0
    %1575 = vmatpush1.bf16.msra.mxu0 0
    %1576 = vmatprep.subr.bf16.mxu0 0
    %1577 = vmatpush1.bf16.msra.mxu0 0
    %1578 = vmatprep.subr.bf16.mxu0 0
    %1579 = vmatpush1.bf16.msra.mxu0 0
    %1580 = vmatprep.mubr.bf16.mxu0 0
    %1581 = vmatmul.mubr.bf16.gmra.mrb[0].mxu0 %v1506
    %v1582 = vpop.f32.mrb[0].mxu0
    %v1583 = vadd.f32 0.0, %v1582
    %v1584 = vpop.f32.mrb[0].mxu0
    %v1585 = vadd.f32 0.0, %v1584
    %v1586 = vpop.f32.mrb[0].mxu0
    %v1587 = vpop.f32.mrb[0].mxu0
    %1588 = vdwg.mxu0
    %v1589 = vadd.f32 %v1502, %v1542
    %v1590 = vadd.f32 %v1503, %v1544
    %v1591 = vadd.f32 %v1504, %v1583
    %v1592 = vadd.f32 %v1505, %v1585
    %v1593 = vxor.u32 %v1589, 2147483648
    %v1594 = vxor.u32 %v1590, 2147483648
    %v1595 = vxor.u32 %v1591, 2147483648
    %v1596 = vmul.f32 %v1593, 1.442695
    %v1597 = vpow.pop %v1596
    %v1598 = vmul.f32 %v1594, 1.442695
    %v1599 = vpow.pop %v1598
    %v1600 = vmul.f32 %v1595, 1.442695
    %v1601 = vpow.pop %v1600
    %v1602 = vadd.f32 %v1597, 1.0
    %v1603 = vadd.f32 %v1599, 1.0
    %v1604 = vadd.f32 %v1601, 1.0
    %v1605 = vrcp.pop %v1602
    %v1606 = vmul.f32 1.0, %v1605
    %v1607 = vrcp.pop %v1603
    %v1608 = vmul.f32 1.0, %v1607
    %v1609 = vrcp.pop %v1604
    %v1610 = vmul.f32 1.0, %v1609
    %v1611 = vtanh.pop %v1592
    %v1612 = vmul.f32 %v1608, %v1499
    %v1613 = vmul.f32 %v1606, %v1611
    %v1614 = vadd.f32 %v1612, %v1613
    %v1615 = vtanh.pop %v1614
    %v1616 = vmul.f32 %v1610, %v1615
    %v1617 = vld [vmem:[%s5] sm:$0xff]
    %v1618 = vld [vmem:[%s5 + $0x8] sm:$0xff]
    %v1619 = vld [vmem:[%s5 + $0x10] sm:$0xff]
    %v1620 = vld [vmem:[%s5 + $0x18] sm:$0xff]
    %v1621 = vld [vmem:[%s5 + $0x20] sm:$0xff]
    %v1622 = vld [vmem:[%s5 + $0x28] sm:$0xff]
    %v1623 = vld [vmem:[%s5 + $0x30] sm:$0xff]
    %v1624 = vld [vmem:[%s5 + $0x38] sm:$0xff]
    %v1625 = vld [vmem:[%s5 + $0x40] sm:$0xff]
    %v1626 = vld [vmem:[%s5 + $0x48] sm:$0xff]
    %v1627 = vld [vmem:[%s5 + $0x50] sm:$0xff]
    %v1628 = vld [vmem:[%s5 + $0x58] sm:$0xff]
    %v1629 = vld [vmem:[%s5 + $0x60] sm:$0xff]
    %v1630 = vld [vmem:[%s5 + $0x68] sm:$0xff]
    %v1631 = vld [vmem:[%s5 + $0x70] sm:$0xff]
    %v1632 = vld [vmem:[%s5 + $0x78] sm:$0xff]
    %v1633 = vld [vmem:[%s6] sm:$0x1]
    %v1635 = vlaneseq
    %v1636 = vshrl.u32 %v1635, 7
    %v1637 = vsub.s32 0, %v1636
    %v1638 = vrot.slane %v1633, %v1637
    %1640 = vmatprep.subr.mxu0 0.0
    %1641 = vmatpush1.msra.mxu0 %v1617
    %1642 = vmatprep.subr.mxu0 0.0
    %1643 = vmatpush1.msra.mxu0 %v1618
    %1644 = vmatprep.subr.mxu0 0.0
    %1645 = vmatpush1.msra.mxu0 %v1619
    %1646 = vmatprep.subr.mxu0 0.0
    %1647 = vmatpush1.msra.mxu0 %v1620
    %1648 = vmatprep.subr.mxu0 0.0
    %1649 = vmatpush1.msra.mxu0 %v1621
    %1650 = vmatprep.subr.mxu0 0.0
    %1651 = vmatpush1.msra.mxu0 %v1622
    %1652 = vmatprep.subr.mxu0 0.0
    %1653 = vmatpush1.msra.mxu0 %v1623
    %1654 = vmatprep.subr.mxu0 0.0
    %1655 = vmatpush1.msra.mxu0 %v1624
    %1656 = vmatprep.subr.mxu0 0.0
    %1657 = vmatpush1.msra.mxu0 %v1625
    %1658 = vmatprep.subr.mxu0 0.0
    %1659 = vmatpush1.msra.mxu0 %v1626
    %1660 = vmatprep.subr.mxu0 0.0
    %1661 = vmatpush1.msra.mxu0 %v1627
    %1662 = vmatprep.subr.mxu0 0.0
    %1663 = vmatpush1.msra.mxu0 %v1628
    %1664 = vmatprep.subr.mxu0 0.0
    %1665 = vmatpush1.msra.mxu0 %v1629
    %1666 = vmatprep.subr.mxu0 0.0
    %1667 = vmatpush1.msra.mxu0 %v1630
    %1668 = vmatprep.subr.mxu0 0.0
    %1669 = vmatpush1.msra.mxu0 %v1631
    %1670 = vmatprep.subr.mxu0 0.0
    %1671 = vmatpush1.msra.mxu0 %v1632
    %1672 = vmatprep.subr.mxu0 0.0
    %1673 = vmatpush1.msra.mxu0 0.0
    %1674 = vmatprep.subr.mxu0 0.0
    %1675 = vmatpush1.msra.mxu0 0.0
    %1676 = vmatprep.subr.mxu0 0.0
    %1677 = vmatpush1.msra.mxu0 0.0
    %1678 = vmatprep.subr.mxu0 0.0
    %1679 = vmatpush1.msra.mxu0 0.0
    %1680 = vmatprep.subr.mxu0 0.0
    %1681 = vmatpush1.msra.mxu0 0.0
    %1682 = vmatprep.subr.mxu0 0.0
    %1683 = vmatpush1.msra.mxu0 0.0
    %1684 = vmatprep.subr.mxu0 0.0
    %1685 = vmatpush1.msra.mxu0 0.0
    %1686 = vmatprep.subr.mxu0 0.0
    %1687 = vmatpush1.msra.mxu0 0.0
    %1688 = vmatprep.subr.mxu0 0.0
    %1689 = vmatpush1.msra.mxu0 0.0
    %1690 = vmatprep.subr.mxu0 0.0
    %1691 = vmatpush1.msra.mxu0 0.0
    %1692 = vmatprep.subr.mxu0 0.0
    %1693 = vmatpush1.msra.mxu0 0.0
    %1694 = vmatprep.subr.mxu0 0.0
    %1695 = vmatpush1.msra.mxu0 0.0
    %1696 = vmatprep.subr.mxu0 0.0
    %1697 = vmatpush1.msra.mxu0 0.0
    %1698 = vmatprep.subr.mxu0 0.0
    %1699 = vmatpush1.msra.mxu0 0.0
    %1700 = vmatprep.subr.mxu0 0.0
    %1701 = vmatpush1.msra.mxu0 0.0
    %1702 = vmatprep.subr.mxu0 0.0
    %1703 = vmatpush1.msra.mxu0 0.0
    %1704 = vmatprep.mubr.f32.mxu0 0.0
    %1705 = vmatmul.mubr.f32.gmra.mrb[0].mxu0 %v1616
    %v1706 = vpop.f32.mrb[0].mxu0
    %v1707 = vadd.f32 %v1638, %v1706
    %v1708 = vpop.f32.mrb[0].mxu0
    %1709 = vdwg.mxu0
    %1710 = vst [vmem:[%s7] sm:$0xff] %v1707
    // Predicated region
    $region38: #{sarcasm_forward.1} parent=1 // pred_check
      _
    $region39: #{sarcasm_forward.1} parent=1 // pred_check_branch
      %1712 = sbr.rel (0) target = $region41
    $region40: #{sarcasm_forward.1} parent=1 // pred_region
      _
    $region41: #{sarcasm_forward.1} parent=1 // pred_fallthru
      _
    // Predicated region
    $region42: #{sarcasm_forward.1} parent=1 // pred_check
      _
    $region43: #{sarcasm_forward.1} parent=1 // pred_check_branch
      %1714 = sbr.rel (0) target = $region45
    $region44: #{sarcasm_forward.1} parent=1 // pred_region
      _
    $region45: #{sarcasm_forward.1} parent=1 // pred_fallthru
      _
    %1715 = vsyncpa [#allocation3], 1
    %1716 = vsyncpa [#allocation5], 1

</llo_original>
